<compile_context>
chip_gen: v5e
topology: v5e:2x2
jax: 0.10.0
libtpu: 0.0.40
codegen_flags: <defaults>
</compile_context>

<pallas_src>
import jax
import jax.numpy as jnp
from jax import lax
from jax.experimental import pallas as pl
from jax.experimental.pallas import tpu as pltpu


def _round_up(x, m):
    return ((x + m - 1) // m) * m


def _make_gru_kernel(seq_len, b_pad, hid_pad):
    """Build a single-invocation GRU kernel for padded dims (b_pad, hid_pad)."""

    def kernel(x_ref, wih_ref, whh_ref, bih_ref, bhh_ref, h_out_ref, xg_ref):
        # x_ref:    (S*Bp, Ep)     all timesteps, flattened (time-major)
        # wih_ref:  (Ep, 3*Hp)     fused input->gate weights, gate order (r, z, n)
        # whh_ref:  (Hp, 3*Hp)     fused hidden->gate weights
        # bih_ref:  (1, 3*Hp)      input biases
        # bhh_ref:  (1, 3*Hp)      hidden biases
        # h_out_ref:(Bp, Hp)       final hidden state (lane-dense)
        # xg_ref:   (S*Bp, 3*Hp)   scratch: precomputed input gate contributions

        # Prologue: input projection for ALL timesteps in one fused MXU call.
        xg_ref[...] = (
            jnp.dot(x_ref[...], wih_ref[...], preferred_element_type=jnp.float32)
            + bih_ref[...]
        )

        def step(t, h):
            # (Bp, 3*Hp) slice for timestep t; sublane-aligned start.
            row = pl.multiple_of(t * b_pad, b_pad)
            xg = xg_ref[pl.ds(row, b_pad), :]
            # Single fused hidden projection on the serial path.
            hg = (
                jnp.dot(h, whh_ref[...], preferred_element_type=jnp.float32)
                + bhh_ref[...]
            )
            r = jax.nn.sigmoid(xg[:, :hid_pad] + hg[:, :hid_pad])
            z = jax.nn.sigmoid(
                xg[:, hid_pad:2 * hid_pad] + hg[:, hid_pad:2 * hid_pad]
            )
            n = jnp.tanh(xg[:, 2 * hid_pad:] + r * hg[:, 2 * hid_pad:])
            return (1.0 - z) * n + z * h

        h0 = jnp.zeros((b_pad, hid_pad), jnp.float32)
        h_final = lax.fori_loop(0, seq_len, step, h0, unroll=True)
        h_out_ref[...] = h_final

    return kernel


def gru_encoder_pallas(embedded, w_ih, w_hh, b_ih, b_hh):
    """embedded: (S, B, E) f32; fused weights (E,3H)/(H,3H), biases (3H,).

    Gate order along the fused axis is (r, z, n), matching PyTorch nn.GRU.
    Returns hidden of shape (1, B, H).
    """
    S, B, E = embedded.shape
    H = w_hh.shape[0]

    Bp = _round_up(B, 8)     # sublane-aligned batch
    Ep = _round_up(E, 128)   # lane-aligned contraction dim
    Hp = _round_up(H, 128)   # lane-aligned gate width (each gate padded to Hp)

    f32 = jnp.float32

    # Pad activations to (S, Bp, Ep) then flatten time into the sublane axis.
    x = jnp.zeros((S, Bp, Ep), f32).at[:, :B, :E].set(embedded.astype(f32))
    x = x.reshape(S * Bp, Ep)

    def pad_w(w, in_dim, in_pad):
        # (in_dim, 3H) -> (in_pad, 3*Hp), each gate in its own 128-aligned block.
        w3 = w.astype(f32).reshape(in_dim, 3, H)
        wp = jnp.zeros((in_pad, 3, Hp), f32).at[:in_dim, :, :H].set(w3)
        return wp.reshape(in_pad, 3 * Hp)

    def pad_b(b):
        b3 = b.astype(f32).reshape(3, H)
        bp = jnp.zeros((3, Hp), f32).at[:, :H].set(b3)
        return bp.reshape(1, 3 * Hp)

    w_ih_p = pad_w(w_ih, E, Ep)
    w_hh_p = pad_w(w_hh, H, Hp)
    b_ih_p = pad_b(b_ih)
    b_hh_p = pad_b(b_hh)

    h_full = pl.pallas_call(
        _make_gru_kernel(S, Bp, Hp),
        out_shape=jax.ShapeDtypeStruct((Bp, Hp), f32),
        # Single invocation (no grid): everything resident in VMEM.
        in_specs=[pl.BlockSpec(memory_space=pltpu.MemorySpace.VMEM)] * 5,
        out_specs=pl.BlockSpec(memory_space=pltpu.MemorySpace.VMEM),
        scratch_shapes=[pltpu.VMEM((S * Bp, 3 * Hp), jnp.float32)],
    )(x, w_ih_p, w_hh_p, b_ih_p, b_hh_p)

    return h_full[:B, :H][None]  # (1, B, H)


def encoder_forward(src, params):
    """src: (S, B) int32 token ids. Returns hidden: (1, B, H)."""
    emb_table, w_ih, w_hh, b_ih, b_hh = params
    embedded = emb_table[src]  # (S, B, E) — embedding gather in plain JAX glue
    # TODO(synk): nn.Dropout applied in eval mode (identity); training-mode
    # dropout would need pltpu.prng_* inside the kernel.
    return gru_encoder_pallas(embedded, w_ih, w_hh, b_ih, b_hh)


def gru_reference(embedded, w_ih, w_hh, b_ih, b_hh):
    """Pure-JAX reference (lax.scan) matching PyTorch nn.GRU semantics."""
    S, B, E = embedded.shape
    H = w_hh.shape[0]

    def step(h, x):
        xg = x @ w_ih + b_ih
        hg = h @ w_hh + b_hh
        r = jax.nn.sigmoid(xg[:, :H] + hg[:, :H])
        z = jax.nn.sigmoid(xg[:, H:2 * H] + hg[:, H:2 * H])
        n = jnp.tanh(xg[:, 2 * H:] + r * hg[:, 2 * H:])
        return (1.0 - z) * n + z * h, None

    h0 = jnp.zeros((B, H), jnp.float32)
    h_final, _ = lax.scan(step, h0, embedded)
    return h_final[None]  # (1, B, H)


if __name__ == "__main__":
    # Module hyper-parameters (small, consistent with the forward pass)
    INPUT_DIM = 16   # vocab size
    EMB_DIM = 32
    HID_DIM = 32
    SEQ_LEN = 8
    BATCH = 2

    key = jax.random.PRNGKey(0)
    k_emb, k_wih, k_whh, k_bih, k_bhh, k_src = jax.random.split(key, 6)

    # Deterministic parameter init (PyTorch-style uniform(-1/sqrt(H), 1/sqrt(H)))
    bound = 1.0 / jnp.sqrt(jnp.float32(HID_DIM))
    emb_table = jax.random.normal(k_emb, (INPUT_DIM, EMB_DIM), jnp.float32)
    # Fused gate layout: (in_features, 3H), gate order (r, z, n) along last axis
    w_ih = jax.random.uniform(k_wih, (EMB_DIM, 3 * HID_DIM), jnp.float32, -bound, bound)
    w_hh = jax.random.uniform(k_whh, (HID_DIM, 3 * HID_DIM), jnp.float32, -bound, bound)
    b_ih = jax.random.uniform(k_bih, (3 * HID_DIM,), jnp.float32, -bound, bound)
    b_hh = jax.random.uniform(k_bhh, (3 * HID_DIM,), jnp.float32, -bound, bound)
    params = (emb_table, w_ih, w_hh, b_ih, b_hh)

    # src: (seq_len, batch) int token ids
    src = jax.random.randint(k_src, (SEQ_LEN, BATCH), 0, INPUT_DIM, jnp.int32)

    fwd = jax.jit(encoder_forward)
    hidden = fwd(src, params)
    hidden = jax.block_until_ready(hidden)
    assert hidden.shape == (1, BATCH, HID_DIM), hidden.shape

    # Cross-check against pure-JAX reference
    embedded = emb_table[src]
    ref = gru_reference(embedded, w_ih, w_hh, b_ih, b_hh)
    max_err = float(jnp.max(jnp.abs(hidden - ref)))
    assert jnp.allclose(hidden, ref, atol=1e-5, rtol=1e-5), max_err

    print("KERNEL_OK")
</pallas_src>

<mosaic_0001>
module attributes {stable_mosaic.version = 11 : i64} {
  func.func @kernel(%arg0: memref<64x128xf32, #tpu.memory_space<vmem>>, %arg1: memref<128x384xf32, #tpu.memory_space<vmem>>, %arg2: memref<128x384xf32, #tpu.memory_space<vmem>>, %arg3: memref<1x384xf32, #tpu.memory_space<vmem>>, %arg4: memref<1x384xf32, #tpu.memory_space<vmem>>, %arg5: memref<8x128xf32, #tpu.memory_space<vmem>>, %arg6: memref<64x384xf32, #tpu.memory_space<vmem>>) attributes {dimension_semantics = [], scalar_prefetch = 0 : i64, scratch_operands = 1 : i64, tpu.core_type = #tpu.core_type<tc>} {
    %c0 = arith.constant 0 : index
    %c0_0 = arith.constant 0 : index
    %0 = vector.load %arg0[%c0, %c0_0] : memref<64x128xf32, #tpu.memory_space<vmem>>, vector<64x128xf32>
    %c0_1 = arith.constant 0 : index
    %c0_2 = arith.constant 0 : index
    %1 = vector.load %arg1[%c0_1, %c0_2] : memref<128x384xf32, #tpu.memory_space<vmem>>, vector<128x384xf32>
    %cst = arith.constant dense<0.000000e+00> : vector<64x384xf32>
    %2 = tpu.matmul %0, %1, %cst {dimension_numbers = #tpu.dot_dimension_numbers<[1], [0], [0], [1], [0, 0, 1, 1], [], []>} : vector<64x128xf32>, vector<128x384xf32>, vector<64x384xf32> -> vector<64x384xf32>
    %c0_3 = arith.constant 0 : index
    %c0_4 = arith.constant 0 : index
    %3 = vector.load %arg3[%c0_3, %c0_4] : memref<1x384xf32, #tpu.memory_space<vmem>>, vector<1x384xf32>
    %4 = vector.broadcast %3 : vector<1x384xf32> to vector<64x384xf32>
    %5 = arith.addf %2, %4 : vector<64x384xf32>
    %c0_5 = arith.constant 0 : index
    %c0_6 = arith.constant 0 : index
    %6 = vector.load %arg6[%c0_5, %c0_6] : memref<64x384xf32, #tpu.memory_space<vmem>>, vector<64x384xf32>
    tpu.vector_store %arg6[%c0_5, %c0_6], %5 {strides = array<i32>} : memref<64x384xf32, #tpu.memory_space<vmem>>, vector<64x384xf32>,
    %cst_7 = arith.constant 0.000000e+00 : f32
    %7 = vector.broadcast %cst_7 : f32 to vector<8x128xf32>
    %c0_i32 = arith.constant 0 : i32
    %c8_i32 = arith.constant 8 : i32
    %8 = arith.muli %c0_i32, %c8_i32 : i32
    %9 = tpu.assume_multiple %8, 8 : i32
    %10 = arith.index_cast %9 : i32 to index
    %c0_8 = arith.constant 0 : index
    %11 = vector.load %arg6[%10, %c0_8] : memref<64x384xf32, #tpu.memory_space<vmem>>, vector<8x384xf32>
    %c0_9 = arith.constant 0 : index
    %c0_10 = arith.constant 0 : index
    %12 = vector.load %arg2[%c0_9, %c0_10] : memref<128x384xf32, #tpu.memory_space<vmem>>, vector<128x384xf32>
    %cst_11 = arith.constant dense<0.000000e+00> : vector<8x384xf32>
    %13 = tpu.matmul %7, %12, %cst_11 {dimension_numbers = #tpu.dot_dimension_numbers<[1], [0], [0], [1], [0, 0, 1, 1], [], []>} : vector<8x128xf32>, vector<128x384xf32>, vector<8x384xf32> -> vector<8x384xf32>
    %c0_12 = arith.constant 0 : index
    %c0_13 = arith.constant 0 : index
    %14 = vector.load %arg4[%c0_12, %c0_13] : memref<1x384xf32, #tpu.memory_space<vmem>>, vector<1x384xf32>
    %15 = vector.broadcast %14 : vector<1x384xf32> to vector<8x384xf32>
    %16 = arith.addf %13, %15 : vector<8x384xf32>
    %17 = vector.extract_strided_slice %11 {offsets = [0, 0], sizes = [8, 128], strides = [1, 1]} : vector<8x384xf32> to vector<8x128xf32>
    %18 = vector.extract_strided_slice %16 {offsets = [0, 0], sizes = [8, 128], strides = [1, 1]} : vector<8x384xf32> to vector<8x128xf32>
    %19 = arith.addf %17, %18 : vector<8x128xf32>
    %20 = arith.negf %19 : vector<8x128xf32>
    %21 = math.exp %20 : vector<8x128xf32>
    %cst_14 = arith.constant 1.000000e+00 : f32
    %22 = vector.broadcast %cst_14 : f32 to vector<8x128xf32>
    %23 = arith.addf %22, %21 : vector<8x128xf32>
    %24 = arith.divf %22, %23 : vector<8x128xf32>
    %25 = vector.extract_strided_slice %11 {offsets = [0, 128], sizes = [8, 128], strides = [1, 1]} : vector<8x384xf32> to vector<8x128xf32>
    %26 = vector.extract_strided_slice %16 {offsets = [0, 128], sizes = [8, 128], strides = [1, 1]} : vector<8x384xf32> to vector<8x128xf32>
    %27 = arith.addf %25, %26 : vector<8x128xf32>
    %28 = arith.negf %27 : vector<8x128xf32>
    %29 = math.exp %28 : vector<8x128xf32>
    %cst_15 = arith.constant 1.000000e+00 : f32
    %30 = vector.broadcast %cst_15 : f32 to vector<8x128xf32>
    %31 = arith.addf %30, %29 : vector<8x128xf32>
    %32 = arith.divf %30, %31 : vector<8x128xf32>
    %33 = vector.extract_strided_slice %11 {offsets = [0, 256], sizes = [8, 128], strides = [1, 1]} : vector<8x384xf32> to vector<8x128xf32>
    %34 = vector.extract_strided_slice %16 {offsets = [0, 256], sizes = [8, 128], strides = [1, 1]} : vector<8x384xf32> to vector<8x128xf32>
    %35 = arith.mulf %24, %34 : vector<8x128xf32>
    %36 = arith.addf %33, %35 : vector<8x128xf32>
    %37 = math.tanh %36 : vector<8x128xf32>
    %cst_16 = arith.constant 1.000000e+00 : f32
    %38 = vector.broadcast %cst_16 : f32 to vector<8x128xf32>
    %39 = arith.subf %38, %32 : vector<8x128xf32>
    %40 = arith.mulf %39, %37 : vector<8x128xf32>
    %41 = arith.mulf %32, %7 : vector<8x128xf32>
    %42 = arith.addf %40, %41 : vector<8x128xf32>
    %c1_i32 = arith.constant 1 : i32
    %c8_i32_17 = arith.constant 8 : i32
    %43 = arith.muli %c1_i32, %c8_i32_17 : i32
    %44 = tpu.assume_multiple %43, 8 : i32
    %45 = arith.index_cast %44 : i32 to index
    %c0_18 = arith.constant 0 : index
    %46 = vector.load %arg6[%45, %c0_18] : memref<64x384xf32, #tpu.memory_space<vmem>>, vector<8x384xf32>
    %c0_19 = arith.constant 0 : index
    %c0_20 = arith.constant 0 : index
    %47 = vector.load %arg2[%c0_19, %c0_20] : memref<128x384xf32, #tpu.memory_space<vmem>>, vector<128x384xf32>
    %cst_21 = arith.constant dense<0.000000e+00> : vector<8x384xf32>
    %48 = tpu.matmul %42, %47, %cst_21 {dimension_numbers = #tpu.dot_dimension_numbers<[1], [0], [0], [1], [0, 0, 1, 1], [], []>} : vector<8x128xf32>, vector<128x384xf32>, vector<8x384xf32> -> vector<8x384xf32>
    %c0_22 = arith.constant 0 : index
    %c0_23 = arith.constant 0 : index
    %49 = vector.load %arg4[%c0_22, %c0_23] : memref<1x384xf32, #tpu.memory_space<vmem>>, vector<1x384xf32>
    %50 = vector.broadcast %49 : vector<1x384xf32> to vector<8x384xf32>
    %51 = arith.addf %48, %50 : vector<8x384xf32>
    %52 = vector.extract_strided_slice %46 {offsets = [0, 0], sizes = [8, 128], strides = [1, 1]} : vector<8x384xf32> to vector<8x128xf32>
    %53 = vector.extract_strided_slice %51 {offsets = [0, 0], sizes = [8, 128], strides = [1, 1]} : vector<8x384xf32> to vector<8x128xf32>
    %54 = arith.addf %52, %53 : vector<8x128xf32>
    %55 = arith.negf %54 : vector<8x128xf32>
    %56 = math.exp %55 : vector<8x128xf32>
    %cst_24 = arith.constant 1.000000e+00 : f32
    %57 = vector.broadcast %cst_24 : f32 to vector<8x128xf32>
    %58 = arith.addf %57, %56 : vector<8x128xf32>
    %59 = arith.divf %57, %58 : vector<8x128xf32>
    %60 = vector.extract_strided_slice %46 {offsets = [0, 128], sizes = [8, 128], strides = [1, 1]} : vector<8x384xf32> to vector<8x128xf32>
    %61 = vector.extract_strided_slice %51 {offsets = [0, 128], sizes = [8, 128], strides = [1, 1]} : vector<8x384xf32> to vector<8x128xf32>
    %62 = arith.addf %60, %61 : vector<8x128xf32>
    %63 = arith.negf %62 : vector<8x128xf32>
    %64 = math.exp %63 : vector<8x128xf32>
    %cst_25 = arith.constant 1.000000e+00 : f32
    %65 = vector.broadcast %cst_25 : f32 to vector<8x128xf32>
    %66 = arith.addf %65, %64 : vector<8x128xf32>
    %67 = arith.divf %65, %66 : vector<8x128xf32>
    %68 = vector.extract_strided_slice %46 {offsets = [0, 256], sizes = [8, 128], strides = [1, 1]} : vector<8x384xf32> to vector<8x128xf32>
    %69 = vector.extract_strided_slice %51 {offsets = [0, 256], sizes = [8, 128], strides = [1, 1]} : vector<8x384xf32> to vector<8x128xf32>
    %70 = arith.mulf %59, %69 : vector<8x128xf32>
    %71 = arith.addf %68, %70 : vector<8x128xf32>
    %72 = math.tanh %71 : vector<8x128xf32>
    %cst_26 = arith.constant 1.000000e+00 : f32
    %73 = vector.broadcast %cst_26 : f32 to vector<8x128xf32>
    %74 = arith.subf %73, %67 : vector<8x128xf32>
    %75 = arith.mulf %74, %72 : vector<8x128xf32>
    %76 = arith.mulf %67, %42 : vector<8x128xf32>
    %77 = arith.addf %75, %76 : vector<8x128xf32>
    %c2_i32 = arith.constant 2 : i32
    %c8_i32_27 = arith.constant 8 : i32
    %78 = arith.muli %c2_i32, %c8_i32_27 : i32
    %79 = tpu.assume_multiple %78, 8 : i32
    %80 = arith.index_cast %79 : i32 to index
    %c0_28 = arith.constant 0 : index
    %81 = vector.load %arg6[%80, %c0_28] : memref<64x384xf32, #tpu.memory_space<vmem>>, vector<8x384xf32>
    %c0_29 = arith.constant 0 : index
    %c0_30 = arith.constant 0 : index
    %82 = vector.load %arg2[%c0_29, %c0_30] : memref<128x384xf32, #tpu.memory_space<vmem>>, vector<128x384xf32>
    %cst_31 = arith.constant dense<0.000000e+00> : vector<8x384xf32>
    %83 = tpu.matmul %77, %82, %cst_31 {dimension_numbers = #tpu.dot_dimension_numbers<[1], [0], [0], [1], [0, 0, 1, 1], [], []>} : vector<8x128xf32>, vector<128x384xf32>, vector<8x384xf32> -> vector<8x384xf32>
    %c0_32 = arith.constant 0 : index
    %c0_33 = arith.constant 0 : index
    %84 = vector.load %arg4[%c0_32, %c0_33] : memref<1x384xf32, #tpu.memory_space<vmem>>, vector<1x384xf32>
    %85 = vector.broadcast %84 : vector<1x384xf32> to vector<8x384xf32>
    %86 = arith.addf %83, %85 : vector<8x384xf32>
    %87 = vector.extract_strided_slice %81 {offsets = [0, 0], sizes = [8, 128], strides = [1, 1]} : vector<8x384xf32> to vector<8x128xf32>
    %88 = vector.extract_strided_slice %86 {offsets = [0, 0], sizes = [8, 128], strides = [1, 1]} : vector<8x384xf32> to vector<8x128xf32>
    %89 = arith.addf %87, %88 : vector<8x128xf32>
    %90 = arith.negf %89 : vector<8x128xf32>
    %91 = math.exp %90 : vector<8x128xf32>
    %cst_34 = arith.constant 1.000000e+00 : f32
    %92 = vector.broadcast %cst_34 : f32 to vector<8x128xf32>
    %93 = arith.addf %92, %91 : vector<8x128xf32>
    %94 = arith.divf %92, %93 : vector<8x128xf32>
    %95 = vector.extract_strided_slice %81 {offsets = [0, 128], sizes = [8, 128], strides = [1, 1]} : vector<8x384xf32> to vector<8x128xf32>
    %96 = vector.extract_strided_slice %86 {offsets = [0, 128], sizes = [8, 128], strides = [1, 1]} : vector<8x384xf32> to vector<8x128xf32>
    %97 = arith.addf %95, %96 : vector<8x128xf32>
    %98 = arith.negf %97 : vector<8x128xf32>
    %99 = math.exp %98 : vector<8x128xf32>
    %cst_35 = arith.constant 1.000000e+00 : f32
    %100 = vector.broadcast %cst_35 : f32 to vector<8x128xf32>
    %101 = arith.addf %100, %99 : vector<8x128xf32>
    %102 = arith.divf %100, %101 : vector<8x128xf32>
    %103 = vector.extract_strided_slice %81 {offsets = [0, 256], sizes = [8, 128], strides = [1, 1]} : vector<8x384xf32> to vector<8x128xf32>
    %104 = vector.extract_strided_slice %86 {offsets = [0, 256], sizes = [8, 128], strides = [1, 1]} : vector<8x384xf32> to vector<8x128xf32>
    %105 = arith.mulf %94, %104 : vector<8x128xf32>
    %106 = arith.addf %103, %105 : vector<8x128xf32>
    %107 = math.tanh %106 : vector<8x128xf32>
    %cst_36 = arith.constant 1.000000e+00 : f32
    %108 = vector.broadcast %cst_36 : f32 to vector<8x128xf32>
    %109 = arith.subf %108, %102 : vector<8x128xf32>
    %110 = arith.mulf %109, %107 : vector<8x128xf32>
    %111 = arith.mulf %102, %77 : vector<8x128xf32>
    %112 = arith.addf %110, %111 : vector<8x128xf32>
    %c3_i32 = arith.constant 3 : i32
    %c8_i32_37 = arith.constant 8 : i32
    %113 = arith.muli %c3_i32, %c8_i32_37 : i32
    %114 = tpu.assume_multiple %113, 8 : i32
    %115 = arith.index_cast %114 : i32 to index
    %c0_38 = arith.constant 0 : index
    %116 = vector.load %arg6[%115, %c0_38] : memref<64x384xf32, #tpu.memory_space<vmem>>, vector<8x384xf32>
    %c0_39 = arith.constant 0 : index
    %c0_40 = arith.constant 0 : index
    %117 = vector.load %arg2[%c0_39, %c0_40] : memref<128x384xf32, #tpu.memory_space<vmem>>, vector<128x384xf32>
    %cst_41 = arith.constant dense<0.000000e+00> : vector<8x384xf32>
    %118 = tpu.matmul %112, %117, %cst_41 {dimension_numbers = #tpu.dot_dimension_numbers<[1], [0], [0], [1], [0, 0, 1, 1], [], []>} : vector<8x128xf32>, vector<128x384xf32>, vector<8x384xf32> -> vector<8x384xf32>
    %c0_42 = arith.constant 0 : index
    %c0_43 = arith.constant 0 : index
    %119 = vector.load %arg4[%c0_42, %c0_43] : memref<1x384xf32, #tpu.memory_space<vmem>>, vector<1x384xf32>
    %120 = vector.broadcast %119 : vector<1x384xf32> to vector<8x384xf32>
    %121 = arith.addf %118, %120 : vector<8x384xf32>
    %122 = vector.extract_strided_slice %116 {offsets = [0, 0], sizes = [8, 128], strides = [1, 1]} : vector<8x384xf32> to vector<8x128xf32>
    %123 = vector.extract_strided_slice %121 {offsets = [0, 0], sizes = [8, 128], strides = [1, 1]} : vector<8x384xf32> to vector<8x128xf32>
    %124 = arith.addf %122, %123 : vector<8x128xf32>
    %125 = arith.negf %124 : vector<8x128xf32>
    %126 = math.exp %125 : vector<8x128xf32>
    %cst_44 = arith.constant 1.000000e+00 : f32
    %127 = vector.broadcast %cst_44 : f32 to vector<8x128xf32>
    %128 = arith.addf %127, %126 : vector<8x128xf32>
    %129 = arith.divf %127, %128 : vector<8x128xf32>
    %130 = vector.extract_strided_slice %116 {offsets = [0, 128], sizes = [8, 128], strides = [1, 1]} : vector<8x384xf32> to vector<8x128xf32>
    %131 = vector.extract_strided_slice %121 {offsets = [0, 128], sizes = [8, 128], strides = [1, 1]} : vector<8x384xf32> to vector<8x128xf32>
    %132 = arith.addf %130, %131 : vector<8x128xf32>
    %133 = arith.negf %132 : vector<8x128xf32>
    %134 = math.exp %133 : vector<8x128xf32>
    %cst_45 = arith.constant 1.000000e+00 : f32
    %135 = vector.broadcast %cst_45 : f32 to vector<8x128xf32>
    %136 = arith.addf %135, %134 : vector<8x128xf32>
    %137 = arith.divf %135, %136 : vector<8x128xf32>
    %138 = vector.extract_strided_slice %116 {offsets = [0, 256], sizes = [8, 128], strides = [1, 1]} : vector<8x384xf32> to vector<8x128xf32>
    %139 = vector.extract_strided_slice %121 {offsets = [0, 256], sizes = [8, 128], strides = [1, 1]} : vector<8x384xf32> to vector<8x128xf32>
    %140 = arith.mulf %129, %139 : vector<8x128xf32>
    %141 = arith.addf %138, %140 : vector<8x128xf32>
    %142 = math.tanh %141 : vector<8x128xf32>
    %cst_46 = arith.constant 1.000000e+00 : f32
    %143 = vector.broadcast %cst_46 : f32 to vector<8x128xf32>
    %144 = arith.subf %143, %137 : vector<8x128xf32>
    %145 = arith.mulf %144, %142 : vector<8x128xf32>
    %146 = arith.mulf %137, %112 : vector<8x128xf32>
    %147 = arith.addf %145, %146 : vector<8x128xf32>
    %c4_i32 = arith.constant 4 : i32
    %c8_i32_47 = arith.constant 8 : i32
    %148 = arith.muli %c4_i32, %c8_i32_47 : i32
    %149 = tpu.assume_multiple %148, 8 : i32
    %150 = arith.index_cast %149 : i32 to index
    %c0_48 = arith.constant 0 : index
    %151 = vector.load %arg6[%150, %c0_48] : memref<64x384xf32, #tpu.memory_space<vmem>>, vector<8x384xf32>
    %c0_49 = arith.constant 0 : index
    %c0_50 = arith.constant 0 : index
    %152 = vector.load %arg2[%c0_49, %c0_50] : memref<128x384xf32, #tpu.memory_space<vmem>>, vector<128x384xf32>
    %cst_51 = arith.constant dense<0.000000e+00> : vector<8x384xf32>
    %153 = tpu.matmul %147, %152, %cst_51 {dimension_numbers = #tpu.dot_dimension_numbers<[1], [0], [0], [1], [0, 0, 1, 1], [], []>} : vector<8x128xf32>, vector<128x384xf32>, vector<8x384xf32> -> vector<8x384xf32>
    %c0_52 = arith.constant 0 : index
    %c0_53 = arith.constant 0 : index
    %154 = vector.load %arg4[%c0_52, %c0_53] : memref<1x384xf32, #tpu.memory_space<vmem>>, vector<1x384xf32>
    %155 = vector.broadcast %154 : vector<1x384xf32> to vector<8x384xf32>
    %156 = arith.addf %153, %155 : vector<8x384xf32>
    %157 = vector.extract_strided_slice %151 {offsets = [0, 0], sizes = [8, 128], strides = [1, 1]} : vector<8x384xf32> to vector<8x128xf32>
    %158 = vector.extract_strided_slice %156 {offsets = [0, 0], sizes = [8, 128], strides = [1, 1]} : vector<8x384xf32> to vector<8x128xf32>
    %159 = arith.addf %157, %158 : vector<8x128xf32>
    %160 = arith.negf %159 : vector<8x128xf32>
    %161 = math.exp %160 : vector<8x128xf32>
    %cst_54 = arith.constant 1.000000e+00 : f32
    %162 = vector.broadcast %cst_54 : f32 to vector<8x128xf32>
    %163 = arith.addf %162, %161 : vector<8x128xf32>
    %164 = arith.divf %162, %163 : vector<8x128xf32>
    %165 = vector.extract_strided_slice %151 {offsets = [0, 128], sizes = [8, 128], strides = [1, 1]} : vector<8x384xf32> to vector<8x128xf32>
    %166 = vector.extract_strided_slice %156 {offsets = [0, 128], sizes = [8, 128], strides = [1, 1]} : vector<8x384xf32> to vector<8x128xf32>
    %167 = arith.addf %165, %166 : vector<8x128xf32>
    %168 = arith.negf %167 : vector<8x128xf32>
    %169 = math.exp %168 : vector<8x128xf32>
    %cst_55 = arith.constant 1.000000e+00 : f32
    %170 = vector.broadcast %cst_55 : f32 to vector<8x128xf32>
    %171 = arith.addf %170, %169 : vector<8x128xf32>
    %172 = arith.divf %170, %171 : vector<8x128xf32>
    %173 = vector.extract_strided_slice %151 {offsets = [0, 256], sizes = [8, 128], strides = [1, 1]} : vector<8x384xf32> to vector<8x128xf32>
    %174 = vector.extract_strided_slice %156 {offsets = [0, 256], sizes = [8, 128], strides = [1, 1]} : vector<8x384xf32> to vector<8x128xf32>
    %175 = arith.mulf %164, %174 : vector<8x128xf32>
    %176 = arith.addf %173, %175 : vector<8x128xf32>
    %177 = math.tanh %176 : vector<8x128xf32>
    %cst_56 = arith.constant 1.000000e+00 : f32
    %178 = vector.broadcast %cst_56 : f32 to vector<8x128xf32>
    %179 = arith.subf %178, %172 : vector<8x128xf32>
    %180 = arith.mulf %179, %177 : vector<8x128xf32>
    %181 = arith.mulf %172, %147 : vector<8x128xf32>
    %182 = arith.addf %180, %181 : vector<8x128xf32>
    %c5_i32 = arith.constant 5 : i32
    %c8_i32_57 = arith.constant 8 : i32
    %183 = arith.muli %c5_i32, %c8_i32_57 : i32
    %184 = tpu.assume_multiple %183, 8 : i32
    %185 = arith.index_cast %184 : i32 to index
    %c0_58 = arith.constant 0 : index
    %186 = vector.load %arg6[%185, %c0_58] : memref<64x384xf32, #tpu.memory_space<vmem>>, vector<8x384xf32>
    %c0_59 = arith.constant 0 : index
    %c0_60 = arith.constant 0 : index
    %187 = vector.load %arg2[%c0_59, %c0_60] : memref<128x384xf32, #tpu.memory_space<vmem>>, vector<128x384xf32>
    %cst_61 = arith.constant dense<0.000000e+00> : vector<8x384xf32>
    %188 = tpu.matmul %182, %187, %cst_61 {dimension_numbers = #tpu.dot_dimension_numbers<[1], [0], [0], [1], [0, 0, 1, 1], [], []>} : vector<8x128xf32>, vector<128x384xf32>, vector<8x384xf32> -> vector<8x384xf32>
    %c0_62 = arith.constant 0 : index
    %c0_63 = arith.constant 0 : index
    %189 = vector.load %arg4[%c0_62, %c0_63] : memref<1x384xf32, #tpu.memory_space<vmem>>, vector<1x384xf32>
    %190 = vector.broadcast %189 : vector<1x384xf32> to vector<8x384xf32>
    %191 = arith.addf %188, %190 : vector<8x384xf32>
    %192 = vector.extract_strided_slice %186 {offsets = [0, 0], sizes = [8, 128], strides = [1, 1]} : vector<8x384xf32> to vector<8x128xf32>
    %193 = vector.extract_strided_slice %191 {offsets = [0, 0], sizes = [8, 128], strides = [1, 1]} : vector<8x384xf32> to vector<8x128xf32>
    %194 = arith.addf %192, %193 : vector<8x128xf32>
    %195 = arith.negf %194 : vector<8x128xf32>
    %196 = math.exp %195 : vector<8x128xf32>
    %cst_64 = arith.constant 1.000000e+00 : f32
    %197 = vector.broadcast %cst_64 : f32 to vector<8x128xf32>
    %198 = arith.addf %197, %196 : vector<8x128xf32>
    %199 = arith.divf %197, %198 : vector<8x128xf32>
    %200 = vector.extract_strided_slice %186 {offsets = [0, 128], sizes = [8, 128], strides = [1, 1]} : vector<8x384xf32> to vector<8x128xf32>
    %201 = vector.extract_strided_slice %191 {offsets = [0, 128], sizes = [8, 128], strides = [1, 1]} : vector<8x384xf32> to vector<8x128xf32>
    %202 = arith.addf %200, %201 : vector<8x128xf32>
    %203 = arith.negf %202 : vector<8x128xf32>
    %204 = math.exp %203 : vector<8x128xf32>
    %cst_65 = arith.constant 1.000000e+00 : f32
    %205 = vector.broadcast %cst_65 : f32 to vector<8x128xf32>
    %206 = arith.addf %205, %204 : vector<8x128xf32>
    %207 = arith.divf %205, %206 : vector<8x128xf32>
    %208 = vector.extract_strided_slice %186 {offsets = [0, 256], sizes = [8, 128], strides = [1, 1]} : vector<8x384xf32> to vector<8x128xf32>
    %209 = vector.extract_strided_slice %191 {offsets = [0, 256], sizes = [8, 128], strides = [1, 1]} : vector<8x384xf32> to vector<8x128xf32>
    %210 = arith.mulf %199, %209 : vector<8x128xf32>
    %211 = arith.addf %208, %210 : vector<8x128xf32>
    %212 = math.tanh %211 : vector<8x128xf32>
    %cst_66 = arith.constant 1.000000e+00 : f32
    %213 = vector.broadcast %cst_66 : f32 to vector<8x128xf32>
    %214 = arith.subf %213, %207 : vector<8x128xf32>
    %215 = arith.mulf %214, %212 : vector<8x128xf32>
    %216 = arith.mulf %207, %182 : vector<8x128xf32>
    %217 = arith.addf %215, %216 : vector<8x128xf32>
    %c6_i32 = arith.constant 6 : i32
    %c8_i32_67 = arith.constant 8 : i32
    %218 = arith.muli %c6_i32, %c8_i32_67 : i32
    %219 = tpu.assume_multiple %218, 8 : i32
    %220 = arith.index_cast %219 : i32 to index
    %c0_68 = arith.constant 0 : index
    %221 = vector.load %arg6[%220, %c0_68] : memref<64x384xf32, #tpu.memory_space<vmem>>, vector<8x384xf32>
    %c0_69 = arith.constant 0 : index
    %c0_70 = arith.constant 0 : index
    %222 = vector.load %arg2[%c0_69, %c0_70] : memref<128x384xf32, #tpu.memory_space<vmem>>, vector<128x384xf32>
    %cst_71 = arith.constant dense<0.000000e+00> : vector<8x384xf32>
    %223 = tpu.matmul %217, %222, %cst_71 {dimension_numbers = #tpu.dot_dimension_numbers<[1], [0], [0], [1], [0, 0, 1, 1], [], []>} : vector<8x128xf32>, vector<128x384xf32>, vector<8x384xf32> -> vector<8x384xf32>
    %c0_72 = arith.constant 0 : index
    %c0_73 = arith.constant 0 : index
    %224 = vector.load %arg4[%c0_72, %c0_73] : memref<1x384xf32, #tpu.memory_space<vmem>>, vector<1x384xf32>
    %225 = vector.broadcast %224 : vector<1x384xf32> to vector<8x384xf32>
    %226 = arith.addf %223, %225 : vector<8x384xf32>
    %227 = vector.extract_strided_slice %221 {offsets = [0, 0], sizes = [8, 128], strides = [1, 1]} : vector<8x384xf32> to vector<8x128xf32>
    %228 = vector.extract_strided_slice %226 {offsets = [0, 0], sizes = [8, 128], strides = [1, 1]} : vector<8x384xf32> to vector<8x128xf32>
    %229 = arith.addf %227, %228 : vector<8x128xf32>
    %230 = arith.negf %229 : vector<8x128xf32>
    %231 = math.exp %230 : vector<8x128xf32>
    %cst_74 = arith.constant 1.000000e+00 : f32
    %232 = vector.broadcast %cst_74 : f32 to vector<8x128xf32>
    %233 = arith.addf %232, %231 : vector<8x128xf32>
    %234 = arith.divf %232, %233 : vector<8x128xf32>
    %235 = vector.extract_strided_slice %221 {offsets = [0, 128], sizes = [8, 128], strides = [1, 1]} : vector<8x384xf32> to vector<8x128xf32>
    %236 = vector.extract_strided_slice %226 {offsets = [0, 128], sizes = [8, 128], strides = [1, 1]} : vector<8x384xf32> to vector<8x128xf32>
    %237 = arith.addf %235, %236 : vector<8x128xf32>
    %238 = arith.negf %237 : vector<8x128xf32>
    %239 = math.exp %238 : vector<8x128xf32>
    %cst_75 = arith.constant 1.000000e+00 : f32
    %240 = vector.broadcast %cst_75 : f32 to vector<8x128xf32>
    %241 = arith.addf %240, %239 : vector<8x128xf32>
    %242 = arith.divf %240, %241 : vector<8x128xf32>
    %243 = vector.extract_strided_slice %221 {offsets = [0, 256], sizes = [8, 128], strides = [1, 1]} : vector<8x384xf32> to vector<8x128xf32>
    %244 = vector.extract_strided_slice %226 {offsets = [0, 256], sizes = [8, 128], strides = [1, 1]} : vector<8x384xf32> to vector<8x128xf32>
    %245 = arith.mulf %234, %244 : vector<8x128xf32>
    %246 = arith.addf %243, %245 : vector<8x128xf32>
    %247 = math.tanh %246 : vector<8x128xf32>
    %cst_76 = arith.constant 1.000000e+00 : f32
    %248 = vector.broadcast %cst_76 : f32 to vector<8x128xf32>
    %249 = arith.subf %248, %242 : vector<8x128xf32>
    %250 = arith.mulf %249, %247 : vector<8x128xf32>
    %251 = arith.mulf %242, %217 : vector<8x128xf32>
    %252 = arith.addf %250, %251 : vector<8x128xf32>
    %c7_i32 = arith.constant 7 : i32
    %c8_i32_77 = arith.constant 8 : i32
    %253 = arith.muli %c7_i32, %c8_i32_77 : i32
    %254 = tpu.assume_multiple %253, 8 : i32
    %255 = arith.index_cast %254 : i32 to index
    %c0_78 = arith.constant 0 : index
    %256 = vector.load %arg6[%255, %c0_78] : memref<64x384xf32, #tpu.memory_space<vmem>>, vector<8x384xf32>
    %c0_79 = arith.constant 0 : index
    %c0_80 = arith.constant 0 : index
    %257 = vector.load %arg2[%c0_79, %c0_80] : memref<128x384xf32, #tpu.memory_space<vmem>>, vector<128x384xf32>
    %cst_81 = arith.constant dense<0.000000e+00> : vector<8x384xf32>
    %258 = tpu.matmul %252, %257, %cst_81 {dimension_numbers = #tpu.dot_dimension_numbers<[1], [0], [0], [1], [0, 0, 1, 1], [], []>} : vector<8x128xf32>, vector<128x384xf32>, vector<8x384xf32> -> vector<8x384xf32>
    %c0_82 = arith.constant 0 : index
    %c0_83 = arith.constant 0 : index
    %259 = vector.load %arg4[%c0_82, %c0_83] : memref<1x384xf32, #tpu.memory_space<vmem>>, vector<1x384xf32>
    %260 = vector.broadcast %259 : vector<1x384xf32> to vector<8x384xf32>
    %261 = arith.addf %258, %260 : vector<8x384xf32>
    %262 = vector.extract_strided_slice %256 {offsets = [0, 0], sizes = [8, 128], strides = [1, 1]} : vector<8x384xf32> to vector<8x128xf32>
    %263 = vector.extract_strided_slice %261 {offsets = [0, 0], sizes = [8, 128], strides = [1, 1]} : vector<8x384xf32> to vector<8x128xf32>
    %264 = arith.addf %262, %263 : vector<8x128xf32>
    %265 = arith.negf %264 : vector<8x128xf32>
    %266 = math.exp %265 : vector<8x128xf32>
    %cst_84 = arith.constant 1.000000e+00 : f32
    %267 = vector.broadcast %cst_84 : f32 to vector<8x128xf32>
    %268 = arith.addf %267, %266 : vector<8x128xf32>
    %269 = arith.divf %267, %268 : vector<8x128xf32>
    %270 = vector.extract_strided_slice %256 {offsets = [0, 128], sizes = [8, 128], strides = [1, 1]} : vector<8x384xf32> to vector<8x128xf32>
    %271 = vector.extract_strided_slice %261 {offsets = [0, 128], sizes = [8, 128], strides = [1, 1]} : vector<8x384xf32> to vector<8x128xf32>
    %272 = arith.addf %270, %271 : vector<8x128xf32>
    %273 = arith.negf %272 : vector<8x128xf32>
    %274 = math.exp %273 : vector<8x128xf32>
    %cst_85 = arith.constant 1.000000e+00 : f32
    %275 = vector.broadcast %cst_85 : f32 to vector<8x128xf32>
    %276 = arith.addf %275, %274 : vector<8x128xf32>
    %277 = arith.divf %275, %276 : vector<8x128xf32>
    %278 = vector.extract_strided_slice %256 {offsets = [0, 256], sizes = [8, 128], strides = [1, 1]} : vector<8x384xf32> to vector<8x128xf32>
    %279 = vector.extract_strided_slice %261 {offsets = [0, 256], sizes = [8, 128], strides = [1, 1]} : vector<8x384xf32> to vector<8x128xf32>
    %280 = arith.mulf %269, %279 : vector<8x128xf32>
    %281 = arith.addf %278, %280 : vector<8x128xf32>
    %282 = math.tanh %281 : vector<8x128xf32>
    %cst_86 = arith.constant 1.000000e+00 : f32
    %283 = vector.broadcast %cst_86 : f32 to vector<8x128xf32>
    %284 = arith.subf %283, %277 : vector<8x128xf32>
    %285 = arith.mulf %284, %282 : vector<8x128xf32>
    %286 = arith.mulf %277, %252 : vector<8x128xf32>
    %287 = arith.addf %285, %286 : vector<8x128xf32>
    %c8_i32_87 = arith.constant 8 : i32
    %c0_88 = arith.constant 0 : index
    %c0_89 = arith.constant 0 : index
    %288 = vector.load %arg5[%c0_88, %c0_89] : memref<8x128xf32, #tpu.memory_space<vmem>>, vector<8x128xf32>
    tpu.vector_store %arg5[%c0_88, %c0_89], %287 {strides = array<i32>} : memref<8x128xf32, #tpu.memory_space<vmem>>, vector<8x128xf32>,
    return
  }
}

</mosaic_0001>

<llo_original>
// kernel: encoder_forward.1
$region0: #{encoder_forward.1}
  #allocation0 [shape = 'u32[]', space=smem, size = 0x4, offset = 0x4, fixed_abs, tag = 'smem constant byte address 0x4 - core index']
  #allocation1 [shape = 'u32[72,128]{1,0:T(1,128)}', space=vmem, size = 0x9000, scoped, tag = 'internal scratch']
  #allocation2 [shape = 'f32[64,384]{1,0:T(8,128)}', space=vmem, size = 0x18000, scoped, tag = 'scratch operand']
  %s0 = inlined_call_operand.vmem [shape: f32[64,128], index: 0, kind: input, shape index: {}]
  %s1 = inlined_call_operand.vmem [shape: f32[128,384], index: 1, kind: input, shape index: {}]
  %s2 = inlined_call_operand.vmem [shape: f32[128,384], index: 2, kind: input, shape index: {}]
  %s3 = inlined_call_operand.vmem [shape: f32[1,384], index: 3, kind: input, shape index: {}]
  %s4 = inlined_call_operand.vmem [shape: f32[1,384], index: 4, kind: input, shape index: {}]
  %s5 = inlined_call_operand.vmem [shape: f32[8,128], index: 5, kind: output, shape index: {}]
  %s6 = sld [smem:[#allocation0]]
  $region30: #{encoder_forward.1} parent=0
    _
  %s8 = ssub.s32 1, %s6
  %s9 = scalar_select 0, %s8, %s6
  // Predicated region
  $region2: #{encoder_forward.1} parent=0 // pred_check
    _
  $region3: #{encoder_forward.1} parent=0 // pred_check_branch
    %11 = sbr.rel (0) target = $region5
  $region4: #{encoder_forward.1} parent=0 // pred_region
    _
  $region5: #{encoder_forward.1} parent=0 // pred_fallthru
    _
  // Predicated region
  $region6: #{encoder_forward.1} parent=0 // pred_check
    _
  $region7: #{encoder_forward.1} parent=0 // pred_check_branch
    %13 = sbr.rel (0) target = $region9
  $region8: #{encoder_forward.1} parent=0 // pred_region
    _
  $region9: #{encoder_forward.1} parent=0 // pred_fallthru
    _
  // Predicated region
  $region10: #{encoder_forward.1} parent=0 // pred_check
    _
  $region11: #{encoder_forward.1} parent=0 // pred_check_branch
    %15 = sbr.rel (0) target = $region13
  $region12: #{encoder_forward.1} parent=0 // pred_region
    _
  $region13: #{encoder_forward.1} parent=0 // pred_fallthru
    _
  // Predicated region
  $region14: #{encoder_forward.1} parent=0 // pred_check
    _
  $region15: #{encoder_forward.1} parent=0 // pred_check_branch
    %17 = sbr.rel (0) target = $region17
  $region16: #{encoder_forward.1} parent=0 // pred_region
    _
  $region17: #{encoder_forward.1} parent=0 // pred_fallthru
    _
  // Predicated region
  $region18: #{encoder_forward.1} parent=0 // pred_check
    _
  $region19: #{encoder_forward.1} parent=0 // pred_check_branch
    %19 = sbr.rel (0) target = $region21
  $region20: #{encoder_forward.1} parent=0 // pred_region
    _
  $region21: #{encoder_forward.1} parent=0 // pred_fallthru
    _
  %v20 = vld [vmem:[%s0] sm:$0xff]
  %v21 = vld [vmem:[%s0 + $0x8] sm:$0xff]
  %v22 = vld [vmem:[%s0 + $0x10] sm:$0xff]
  %v23 = vld [vmem:[%s0 + $0x18] sm:$0xff]
  %v24 = vld [vmem:[%s0 + $0x20] sm:$0xff]
  %v25 = vld [vmem:[%s0 + $0x28] sm:$0xff]
  %v26 = vld [vmem:[%s0 + $0x30] sm:$0xff]
  %v27 = vld [vmem:[%s0 + $0x38] sm:$0xff]
  %v28 = vld [vmem:[%s1] sm:$0xff]
  %v29 = vld [vmem:[%s1 + $0x8] sm:$0xff]
  %v30 = vld [vmem:[%s1 + $0x10] sm:$0xff]
  %v31 = vld [vmem:[%s1 + $0x18] sm:$0xff]
  %v32 = vld [vmem:[%s1 + $0x20] sm:$0xff]
  %v33 = vld [vmem:[%s1 + $0x28] sm:$0xff]
  %v34 = vld [vmem:[%s1 + $0x30] sm:$0xff]
  %v35 = vld [vmem:[%s1 + $0x38] sm:$0xff]
  %v36 = vld [vmem:[%s1 + $0x40] sm:$0xff]
  %v37 = vld [vmem:[%s1 + $0x48] sm:$0xff]
  %v38 = vld [vmem:[%s1 + $0x50] sm:$0xff]
  %v39 = vld [vmem:[%s1 + $0x58] sm:$0xff]
  %v40 = vld [vmem:[%s1 + $0x60] sm:$0xff]
  %v41 = vld [vmem:[%s1 + $0x68] sm:$0xff]
  %v42 = vld [vmem:[%s1 + $0x70] sm:$0xff]
  %v43 = vld [vmem:[%s1 + $0x78] sm:$0xff]
  %v44 = vld [vmem:[%s1 + $0x80] sm:$0xff]
  %v45 = vld [vmem:[%s1 + $0x88] sm:$0xff]
  %v46 = vld [vmem:[%s1 + $0x90] sm:$0xff]
  %v47 = vld [vmem:[%s1 + $0x98] sm:$0xff]
  %v48 = vld [vmem:[%s1 + $0xa0] sm:$0xff]
  %v49 = vld [vmem:[%s1 + $0xa8] sm:$0xff]
  %v50 = vld [vmem:[%s1 + $0xb0] sm:$0xff]
  %v51 = vld [vmem:[%s1 + $0xb8] sm:$0xff]
  %v52 = vld [vmem:[%s1 + $0xc0] sm:$0xff]
  %v53 = vld [vmem:[%s1 + $0xc8] sm:$0xff]
  %v54 = vld [vmem:[%s1 + $0xd0] sm:$0xff]
  %v55 = vld [vmem:[%s1 + $0xd8] sm:$0xff]
  %v56 = vld [vmem:[%s1 + $0xe0] sm:$0xff]
  %v57 = vld [vmem:[%s1 + $0xe8] sm:$0xff]
  %v58 = vld [vmem:[%s1 + $0xf0] sm:$0xff]
  %v59 = vld [vmem:[%s1 + $0xf8] sm:$0xff]
  %v60 = vld [vmem:[%s1 + $0x100] sm:$0xff]
  %v61 = vld [vmem:[%s1 + $0x108] sm:$0xff]
  %v62 = vld [vmem:[%s1 + $0x110] sm:$0xff]
  %v63 = vld [vmem:[%s1 + $0x118] sm:$0xff]
  %v64 = vld [vmem:[%s1 + $0x120] sm:$0xff]
  %v65 = vld [vmem:[%s1 + $0x128] sm:$0xff]
  %v66 = vld [vmem:[%s1 + $0x130] sm:$0xff]
  %v67 = vld [vmem:[%s1 + $0x138] sm:$0xff]
  %v68 = vld [vmem:[%s1 + $0x140] sm:$0xff]
  %v69 = vld [vmem:[%s1 + $0x148] sm:$0xff]
  %v70 = vld [vmem:[%s1 + $0x150] sm:$0xff]
  %v71 = vld [vmem:[%s1 + $0x158] sm:$0xff]
  %v72 = vld [vmem:[%s1 + $0x160] sm:$0xff]
  %v73 = vld [vmem:[%s1 + $0x168] sm:$0xff]
  %v74 = vld [vmem:[%s1 + $0x170] sm:$0xff]
  %v75 = vld [vmem:[%s1 + $0x178] sm:$0xff]
  %v76 = vld [vmem:[%s3] sm:$0x7]
  %v78 = vperm.slane %v76, 0
  %v79 = vperm.slane %v76, 1
  %v80 = vperm.slane %v76, 2
  %84 = vmatpush.msra.mxu0 %v73
  %85 = vmatpush.msra.mxu0 %v70
  %86 = vmatpush.msra.mxu0 %v67
  %87 = vmatpush.msra.mxu0 %v64
  %88 = vmatpush.msra.mxu0 %v61
  %89 = vmatpush.msra.mxu0 %v58
  %90 = vmatpush.msra.mxu0 %v55
  %91 = vmatpush.msra.mxu0 %v52
  %92 = vmatpush.msra.mxu0 %v49
  %93 = vmatpush.msra.mxu0 %v46
  %94 = vmatpush.msra.mxu0 %v43
  %95 = vmatpush.msra.mxu0 %v40
  %96 = vmatpush.msra.mxu0 %v37
  %97 = vmatpush.msra.mxu0 %v34
  %98 = vmatpush.msra.mxu0 %v31
  %99 = vmatpush.msra.mxu0 %v28
  %100 = vmatmul.f32.gmra.mxu0 %v20
  %v101 = vpop.f32.mrf.mxu0
  %v102 = vadd.f32 %v78, %v101
  %103 = vmatmul.f32.gmra.mxu0 %v21
  %v104 = vpop.f32.mrf.mxu0
  %v105 = vadd.f32 %v78, %v104
  %106 = vmatmul.f32.gmra.mxu0 %v22
  %v107 = vpop.f32.mrf.mxu0
  %v108 = vadd.f32 %v78, %v107
  %109 = vmatmul.f32.gmra.mxu0 %v23
  %v110 = vpop.f32.mrf.mxu0
  %v111 = vadd.f32 %v78, %v110
  %112 = vmatmul.f32.gmra.mxu0 %v24
  %v113 = vpop.f32.mrf.mxu0
  %v114 = vadd.f32 %v78, %v113
  %115 = vmatmul.f32.gmra.mxu0 %v25
  %v116 = vpop.f32.mrf.mxu0
  %v117 = vadd.f32 %v78, %v116
  %118 = vmatmul.f32.gmra.mxu0 %v26
  %v119 = vpop.f32.mrf.mxu0
  %v120 = vadd.f32 %v78, %v119
  %121 = vmatmul.f32.gmra.mxu0 %v27
  %v122 = vpop.f32.mrf.mxu0
  %v123 = vadd.f32 %v78, %v122
  %124 = vdwg.mxu0
  %125 = vmatpush.msra.mxu0 %v74
  %126 = vmatpush.msra.mxu0 %v71
  %127 = vmatpush.msra.mxu0 %v68
  %128 = vmatpush.msra.mxu0 %v65
  %129 = vmatpush.msra.mxu0 %v62
  %130 = vmatpush.msra.mxu0 %v59
  %131 = vmatpush.msra.mxu0 %v56
  %132 = vmatpush.msra.mxu0 %v53
  %133 = vmatpush.msra.mxu0 %v50
  %134 = vmatpush.msra.mxu0 %v47
  %135 = vmatpush.msra.mxu0 %v44
  %136 = vmatpush.msra.mxu0 %v41
  %137 = vmatpush.msra.mxu0 %v38
  %138 = vmatpush.msra.mxu0 %v35
  %139 = vmatpush.msra.mxu0 %v32
  %140 = vmatpush.msra.mxu0 %v29
  %141 = vmatmul.f32.gmra.mxu0 %v20
  %v142 = vpop.f32.mrf.mxu0
  %v143 = vadd.f32 %v79, %v142
  %144 = vmatmul.f32.gmra.mxu0 %v21
  %v145 = vpop.f32.mrf.mxu0
  %v146 = vadd.f32 %v79, %v145
  %147 = vmatmul.f32.gmra.mxu0 %v22
  %v148 = vpop.f32.mrf.mxu0
  %v149 = vadd.f32 %v79, %v148
  %150 = vmatmul.f32.gmra.mxu0 %v23
  %v151 = vpop.f32.mrf.mxu0
  %v152 = vadd.f32 %v79, %v151
  %153 = vmatmul.f32.gmra.mxu0 %v24
  %v154 = vpop.f32.mrf.mxu0
  %v155 = vadd.f32 %v79, %v154
  %156 = vmatmul.f32.gmra.mxu0 %v25
  %v157 = vpop.f32.mrf.mxu0
  %v158 = vadd.f32 %v79, %v157
  %159 = vmatmul.f32.gmra.mxu0 %v26
  %v160 = vpop.f32.mrf.mxu0
  %v161 = vadd.f32 %v79, %v160
  %162 = vmatmul.f32.gmra.mxu0 %v27
  %v163 = vpop.f32.mrf.mxu0
  %v164 = vadd.f32 %v79, %v163
  %165 = vdwg.mxu0
  %166 = vmatpush.msra.mxu0 %v75
  %167 = vmatpush.msra.mxu0 %v72
  %168 = vmatpush.msra.mxu0 %v69
  %169 = vmatpush.msra.mxu0 %v66
  %170 = vmatpush.msra.mxu0 %v63
  %171 = vmatpush.msra.mxu0 %v60
  %172 = vmatpush.msra.mxu0 %v57
  %173 = vmatpush.msra.mxu0 %v54
  %174 = vmatpush.msra.mxu0 %v51
  %175 = vmatpush.msra.mxu0 %v48
  %176 = vmatpush.msra.mxu0 %v45
  %177 = vmatpush.msra.mxu0 %v42
  %178 = vmatpush.msra.mxu0 %v39
  %179 = vmatpush.msra.mxu0 %v36
  %180 = vmatpush.msra.mxu0 %v33
  %181 = vmatpush.msra.mxu0 %v30
  %182 = vmatmul.f32.gmra.mxu0 %v20
  %v183 = vpop.f32.mrf.mxu0
  %v184 = vadd.f32 %v80, %v183
  %185 = vmatmul.f32.gmra.mxu0 %v21
  %v186 = vpop.f32.mrf.mxu0
  %v187 = vadd.f32 %v80, %v186
  %188 = vmatmul.f32.gmra.mxu0 %v22
  %v189 = vpop.f32.mrf.mxu0
  %v190 = vadd.f32 %v80, %v189
  %191 = vmatmul.f32.gmra.mxu0 %v23
  %v192 = vpop.f32.mrf.mxu0
  %v193 = vadd.f32 %v80, %v192
  %194 = vmatmul.f32.gmra.mxu0 %v24
  %v195 = vpop.f32.mrf.mxu0
  %v196 = vadd.f32 %v80, %v195
  %197 = vmatmul.f32.gmra.mxu0 %v25
  %v198 = vpop.f32.mrf.mxu0
  %v199 = vadd.f32 %v80, %v198
  %200 = vmatmul.f32.gmra.mxu0 %v26
  %v201 = vpop.f32.mrf.mxu0
  %v202 = vadd.f32 %v80, %v201
  %203 = vmatmul.f32.gmra.mxu0 %v27
  %v204 = vpop.f32.mrf.mxu0
  %v205 = vadd.f32 %v80, %v204
  %206 = vdwg.mxu0
  %207 = vst [vmem:[#allocation2] sm:$0xff] %v102
  %208 = vst [vmem:[#allocation2 + $0x8] sm:$0xff] %v143
  %209 = vst [vmem:[#allocation2 + $0x10] sm:$0xff] %v184
  %210 = vst [vmem:[#allocation2 + $0x18] sm:$0xff] %v105
  %211 = vst [vmem:[#allocation2 + $0x20] sm:$0xff] %v146
  %212 = vst [vmem:[#allocation2 + $0x28] sm:$0xff] %v187
  %213 = vst [vmem:[#allocation2 + $0x30] sm:$0xff] %v108
  %214 = vst [vmem:[#allocation2 + $0x38] sm:$0xff] %v149
  %215 = vst [vmem:[#allocation2 + $0x40] sm:$0xff] %v190
  %216 = vst [vmem:[#allocation2 + $0x48] sm:$0xff] %v111
  %217 = vst [vmem:[#allocation2 + $0x50] sm:$0xff] %v152
  %218 = vst [vmem:[#allocation2 + $0x58] sm:$0xff] %v193
  %219 = vst [vmem:[#allocation2 + $0x60] sm:$0xff] %v114
  %220 = vst [vmem:[#allocation2 + $0x68] sm:$0xff] %v155
  %221 = vst [vmem:[#allocation2 + $0x70] sm:$0xff] %v196
  %222 = vst [vmem:[#allocation2 + $0x78] sm:$0xff] %v117
  %223 = vst [vmem:[#allocation2 + $0x80] sm:$0xff] %v158
  %224 = vst [vmem:[#allocation2 + $0x88] sm:$0xff] %v199
  %225 = vst [vmem:[#allocation2 + $0x90] sm:$0xff] %v120
  %226 = vst [vmem:[#allocation2 + $0x98] sm:$0xff] %v161
  %227 = vst [vmem:[#allocation2 + $0xa0] sm:$0xff] %v202
  %228 = vst [vmem:[#allocation2 + $0xa8] sm:$0xff] %v123
  %229 = vst [vmem:[#allocation2 + $0xb0] sm:$0xff] %v164
  %230 = vst [vmem:[#allocation2 + $0xb8] sm:$0xff] %v205
  %s231 = smul.u32 0, 3
  %s232 = smul.addr %s231, 8
  %s233 = scalar_lea.vmem [#allocation2], %s232
  %v234 = vld [vmem:[%s233] sm:$0xff]
  %v235 = vld [vmem:[%s233 + $0x8] sm:$0xff]
  %v236 = vld [vmem:[%s233 + $0x10] sm:$0xff]
  %v237 = vld [vmem:[%s2] sm:$0xff]
  %v238 = vld [vmem:[%s2 + $0x8] sm:$0xff]
  %v239 = vld [vmem:[%s2 + $0x10] sm:$0xff]
  %v240 = vld [vmem:[%s2 + $0x18] sm:$0xff]
  %v241 = vld [vmem:[%s2 + $0x20] sm:$0xff]
  %v242 = vld [vmem:[%s2 + $0x28] sm:$0xff]
  %v243 = vld [vmem:[%s2 + $0x30] sm:$0xff]
  %v244 = vld [vmem:[%s2 + $0x38] sm:$0xff]
  %v245 = vld [vmem:[%s2 + $0x40] sm:$0xff]
  %v246 = vld [vmem:[%s2 + $0x48] sm:$0xff]
  %v247 = vld [vmem:[%s2 + $0x50] sm:$0xff]
  %v248 = vld [vmem:[%s2 + $0x58] sm:$0xff]
  %v249 = vld [vmem:[%s2 + $0x60] sm:$0xff]
  %v250 = vld [vmem:[%s2 + $0x68] sm:$0xff]
  %v251 = vld [vmem:[%s2 + $0x70] sm:$0xff]
  %v252 = vld [vmem:[%s2 + $0x78] sm:$0xff]
  %v253 = vld [vmem:[%s2 + $0x80] sm:$0xff]
  %v254 = vld [vmem:[%s2 + $0x88] sm:$0xff]
  %v255 = vld [vmem:[%s2 + $0x90] sm:$0xff]
  %v256 = vld [vmem:[%s2 + $0x98] sm:$0xff]
  %v257 = vld [vmem:[%s2 + $0xa0] sm:$0xff]
  %v258 = vld [vmem:[%s2 + $0xa8] sm:$0xff]
  %v259 = vld [vmem:[%s2 + $0xb0] sm:$0xff]
  %v260 = vld [vmem:[%s2 + $0xb8] sm:$0xff]
  %v261 = vld [vmem:[%s2 + $0xc0] sm:$0xff]
  %v262 = vld [vmem:[%s2 + $0xc8] sm:$0xff]
  %v263 = vld [vmem:[%s2 + $0xd0] sm:$0xff]
  %v264 = vld [vmem:[%s2 + $0xd8] sm:$0xff]
  %v265 = vld [vmem:[%s2 + $0xe0] sm:$0xff]
  %v266 = vld [vmem:[%s2 + $0xe8] sm:$0xff]
  %v267 = vld [vmem:[%s2 + $0xf0] sm:$0xff]
  %v268 = vld [vmem:[%s2 + $0xf8] sm:$0xff]
  %v269 = vld [vmem:[%s2 + $0x100] sm:$0xff]
  %v270 = vld [vmem:[%s2 + $0x108] sm:$0xff]
  %v271 = vld [vmem:[%s2 + $0x110] sm:$0xff]
  %v272 = vld [vmem:[%s2 + $0x118] sm:$0xff]
  %v273 = vld [vmem:[%s2 + $0x120] sm:$0xff]
  %v274 = vld [vmem:[%s2 + $0x128] sm:$0xff]
  %v275 = vld [vmem:[%s2 + $0x130] sm:$0xff]
  %v276 = vld [vmem:[%s2 + $0x138] sm:$0xff]
  %v277 = vld [vmem:[%s2 + $0x140] sm:$0xff]
  %v278 = vld [vmem:[%s2 + $0x148] sm:$0xff]
  %v279 = vld [vmem:[%s2 + $0x150] sm:$0xff]
  %v280 = vld [vmem:[%s2 + $0x158] sm:$0xff]
  %v281 = vld [vmem:[%s2 + $0x160] sm:$0xff]
  %v282 = vld [vmem:[%s2 + $0x168] sm:$0xff]
  %v283 = vld [vmem:[%s2 + $0x170] sm:$0xff]
  %v284 = vld [vmem:[%s2 + $0x178] sm:$0xff]
  %v285 = vld [vmem:[%s4] sm:$0x7]
  %v287 = vperm.slane %v285, 0
  %v288 = vperm.slane %v285, 1
  %v289 = vperm.slane %v285, 2
  %293 = vmatpush.msra.mxu0 %v282
  %294 = vmatpush.msra.mxu0 %v279
  %295 = vmatpush.msra.mxu0 %v276
  %296 = vmatpush.msra.mxu0 %v273
  %297 = vmatpush.msra.mxu0 %v270
  %298 = vmatpush.msra.mxu0 %v267
  %299 = vmatpush.msra.mxu0 %v264
  %300 = vmatpush.msra.mxu0 %v261
  %301 = vmatpush.msra.mxu0 %v258
  %302 = vmatpush.msra.mxu0 %v255
  %303 = vmatpush.msra.mxu0 %v252
  %304 = vmatpush.msra.mxu0 %v249
  %305 = vmatpush.msra.mxu0 %v246
  %306 = vmatpush.msra.mxu0 %v243
  %307 = vmatpush.msra.mxu0 %v240
  %308 = vmatpush.msra.mxu0 %v237
  %309 = vmatmul.f32.gmra.mxu0 0.0
  %v310 = vpop.f32.mrf.mxu0
  %v311 = vadd.f32 %v287, %v310
  %312 = vdwg.mxu0
  %313 = vmatpush.msra.mxu0 %v283
  %314 = vmatpush.msra.mxu0 %v280
  %315 = vmatpush.msra.mxu0 %v277
  %316 = vmatpush.msra.mxu0 %v274
  %317 = vmatpush.msra.mxu0 %v271
  %318 = vmatpush.msra.mxu0 %v268
  %319 = vmatpush.msra.mxu0 %v265
  %320 = vmatpush.msra.mxu0 %v262
  %321 = vmatpush.msra.mxu0 %v259
  %322 = vmatpush.msra.mxu0 %v256
  %323 = vmatpush.msra.mxu0 %v253
  %324 = vmatpush.msra.mxu0 %v250
  %325 = vmatpush.msra.mxu0 %v247
  %326 = vmatpush.msra.mxu0 %v244
  %327 = vmatpush.msra.mxu0 %v241
  %328 = vmatpush.msra.mxu0 %v238
  %329 = vmatmul.f32.gmra.mxu0 0.0
  %v330 = vpop.f32.mrf.mxu0
  %v331 = vadd.f32 %v288, %v330
  %332 = vdwg.mxu0
  %333 = vmatpush.msra.mxu0 %v284
  %334 = vmatpush.msra.mxu0 %v281
  %335 = vmatpush.msra.mxu0 %v278
  %336 = vmatpush.msra.mxu0 %v275
  %337 = vmatpush.msra.mxu0 %v272
  %338 = vmatpush.msra.mxu0 %v269
  %339 = vmatpush.msra.mxu0 %v266
  %340 = vmatpush.msra.mxu0 %v263
  %341 = vmatpush.msra.mxu0 %v260
  %342 = vmatpush.msra.mxu0 %v257
  %343 = vmatpush.msra.mxu0 %v254
  %344 = vmatpush.msra.mxu0 %v251
  %345 = vmatpush.msra.mxu0 %v248
  %346 = vmatpush.msra.mxu0 %v245
  %347 = vmatpush.msra.mxu0 %v242
  %348 = vmatpush.msra.mxu0 %v239
  %349 = vmatmul.f32.gmra.mxu0 0.0
  %v350 = vpop.f32.mrf.mxu0
  %v351 = vadd.f32 %v289, %v350
  %352 = vdwg.mxu0
  %v353 = vadd.f32 %v234, %v311
  %v354 = vxor.u32 %v353, 2147483648
  %v355 = vmul.f32 %v354, 1.442695
  %v356 = vpow.pop %v355
  %v357 = vadd.f32 %v356, 1.0
  %v358 = vrcp.pop %v357
  %v359 = vmul.f32 %v357, %v358
  %v360 = vsub.f32 1.0, %v359
  %v361 = vmul.f32 %v358, %v360
  %v362 = vadd.f32 %v358, %v361
  %vm363 = vweird.f32 %v357
  %vm364 = vweird.f32 %v358
  %vm365 = vmor %vm363, %vm364
  %v366 = vsel %vm365, %v358, %v362
  %v367 = vand.u32 2147483647, %v357
  %vm368 = vcmp.eq.f32.partialorder %v367, 8.507059e+37
  %v369 = vand.u32 %v357, 2147483648
  %v370 = vor.u32 1.1754944e-38, %v369
  %v371 = vsel %vm368, %v370, %v366
  %v372 = vmul.f32 1.0, %v371
  %v373 = vadd.f32 %v235, %v331
  %v374 = vxor.u32 %v373, 2147483648
  %v375 = vmul.f32 %v374, 1.442695
  %v376 = vpow.pop %v375
  %v377 = vadd.f32 %v376, 1.0
  %v378 = vrcp.pop %v377
  %v379 = vmul.f32 %v377, %v378
  %v380 = vsub.f32 1.0, %v379
  %v381 = vmul.f32 %v378, %v380
  %v382 = vadd.f32 %v378, %v381
  %vm383 = vweird.f32 %v377
  %vm384 = vweird.f32 %v378
  %vm385 = vmor %vm383, %vm384
  %v386 = vsel %vm385, %v378, %v382
  %v387 = vand.u32 2147483647, %v377
  %vm388 = vcmp.eq.f32.partialorder %v387, 8.507059e+37
  %v389 = vand.u32 %v377, 2147483648
  %v390 = vor.u32 1.1754944e-38, %v389
  %v391 = vsel %vm388, %v390, %v386
  %v392 = vmul.f32 1.0, %v391
  %v393 = vmul.f32 %v372, %v351
  %v394 = vadd.f32 %v236, %v393
  %v395 = vtanh.pop %v394
  %v396 = vsub.f32 1.0, %v392
  %v397 = vmul.f32 %v396, %v395
  %v398 = vmul.f32 %v392, 0.0
  %v399 = vadd.f32 %v397, %v398
  %s400 = smul.u32 1, 3
  %s401 = smul.addr %s400, 8
  %s402 = scalar_lea.vmem [#allocation2], %s401
  %v403 = vld [vmem:[%s402] sm:$0xff]
  %v404 = vld [vmem:[%s402 + $0x8] sm:$0xff]
  %v405 = vld [vmem:[%s402 + $0x10] sm:$0xff]
  %406 = vmatpush.msra.mxu0 %v282
  %407 = vmatpush.msra.mxu0 %v279
  %408 = vmatpush.msra.mxu0 %v276
  %409 = vmatpush.msra.mxu0 %v273
  %410 = vmatpush.msra.mxu0 %v270
  %411 = vmatpush.msra.mxu0 %v267
  %412 = vmatpush.msra.mxu0 %v264
  %413 = vmatpush.msra.mxu0 %v261
  %414 = vmatpush.msra.mxu0 %v258
  %415 = vmatpush.msra.mxu0 %v255
  %416 = vmatpush.msra.mxu0 %v252
  %417 = vmatpush.msra.mxu0 %v249
  %418 = vmatpush.msra.mxu0 %v246
  %419 = vmatpush.msra.mxu0 %v243
  %420 = vmatpush.msra.mxu0 %v240
  %421 = vmatpush.msra.mxu0 %v237
  %422 = vmatmul.f32.gmra.mxu0 %v399
  %v423 = vpop.f32.mrf.mxu0
  %v424 = vadd.f32 %v287, %v423
  %425 = vdwg.mxu0
  %426 = vmatpush.msra.mxu0 %v283
  %427 = vmatpush.msra.mxu0 %v280
  %428 = vmatpush.msra.mxu0 %v277
  %429 = vmatpush.msra.mxu0 %v274
  %430 = vmatpush.msra.mxu0 %v271
  %431 = vmatpush.msra.mxu0 %v268
  %432 = vmatpush.msra.mxu0 %v265
  %433 = vmatpush.msra.mxu0 %v262
  %434 = vmatpush.msra.mxu0 %v259
  %435 = vmatpush.msra.mxu0 %v256
  %436 = vmatpush.msra.mxu0 %v253
  %437 = vmatpush.msra.mxu0 %v250
  %438 = vmatpush.msra.mxu0 %v247
  %439 = vmatpush.msra.mxu0 %v244
  %440 = vmatpush.msra.mxu0 %v241
  %441 = vmatpush.msra.mxu0 %v238
  %442 = vmatmul.f32.gmra.mxu0 %v399
  %v443 = vpop.f32.mrf.mxu0
  %v444 = vadd.f32 %v288, %v443
  %445 = vdwg.mxu0
  %446 = vmatpush.msra.mxu0 %v284
  %447 = vmatpush.msra.mxu0 %v281
  %448 = vmatpush.msra.mxu0 %v278
  %449 = vmatpush.msra.mxu0 %v275
  %450 = vmatpush.msra.mxu0 %v272
  %451 = vmatpush.msra.mxu0 %v269
  %452 = vmatpush.msra.mxu0 %v266
  %453 = vmatpush.msra.mxu0 %v263
  %454 = vmatpush.msra.mxu0 %v260
  %455 = vmatpush.msra.mxu0 %v257
  %456 = vmatpush.msra.mxu0 %v254
  %457 = vmatpush.msra.mxu0 %v251
  %458 = vmatpush.msra.mxu0 %v248
  %459 = vmatpush.msra.mxu0 %v245
  %460 = vmatpush.msra.mxu0 %v242
  %461 = vmatpush.msra.mxu0 %v239
  %462 = vmatmul.f32.gmra.mxu0 %v399
  %v463 = vpop.f32.mrf.mxu0
  %v464 = vadd.f32 %v289, %v463
  %465 = vdwg.mxu0
  %v466 = vadd.f32 %v403, %v424
  %v467 = vxor.u32 %v466, 2147483648
  %v468 = vmul.f32 %v467, 1.442695
  %v469 = vpow.pop %v468
  %v470 = vadd.f32 %v469, 1.0
  %v471 = vrcp.pop %v470
  %v472 = vmul.f32 %v470, %v471
  %v473 = vsub.f32 1.0, %v472
  %v474 = vmul.f32 %v471, %v473
  %v475 = vadd.f32 %v471, %v474
  %vm476 = vweird.f32 %v470
  %vm477 = vweird.f32 %v471
  %vm478 = vmor %vm476, %vm477
  %v479 = vsel %vm478, %v471, %v475
  %v480 = vand.u32 2147483647, %v470
  %vm481 = vcmp.eq.f32.partialorder %v480, 8.507059e+37
  %v482 = vand.u32 %v470, 2147483648
  %v483 = vor.u32 1.1754944e-38, %v482
  %v484 = vsel %vm481, %v483, %v479
  %v485 = vmul.f32 1.0, %v484
  %v486 = vadd.f32 %v404, %v444
  %v487 = vxor.u32 %v486, 2147483648
  %v488 = vmul.f32 %v487, 1.442695
  %v489 = vpow.pop %v488
  %v490 = vadd.f32 %v489, 1.0
  %v491 = vrcp.pop %v490
  %v492 = vmul.f32 %v490, %v491
  %v493 = vsub.f32 1.0, %v492
  %v494 = vmul.f32 %v491, %v493
  %v495 = vadd.f32 %v491, %v494
  %vm496 = vweird.f32 %v490
  %vm497 = vweird.f32 %v491
  %vm498 = vmor %vm496, %vm497
  %v499 = vsel %vm498, %v491, %v495
  %v500 = vand.u32 2147483647, %v490
  %vm501 = vcmp.eq.f32.partialorder %v500, 8.507059e+37
  %v502 = vand.u32 %v490, 2147483648
  %v503 = vor.u32 1.1754944e-38, %v502
  %v504 = vsel %vm501, %v503, %v499
  %v505 = vmul.f32 1.0, %v504
  %v506 = vmul.f32 %v485, %v464
  %v507 = vadd.f32 %v405, %v506
  %v508 = vtanh.pop %v507
  %v509 = vsub.f32 1.0, %v505
  %v510 = vmul.f32 %v509, %v508
  %v511 = vmul.f32 %v505, %v399
  %v512 = vadd.f32 %v510, %v511
  %s513 = smul.u32 2, 3
  %s514 = smul.addr %s513, 8
  %s515 = scalar_lea.vmem [#allocation2], %s514
  %v516 = vld [vmem:[%s515] sm:$0xff]
  %v517 = vld [vmem:[%s515 + $0x8] sm:$0xff]
  %v518 = vld [vmem:[%s515 + $0x10] sm:$0xff]
  %519 = vmatpush.msra.mxu0 %v282
  %520 = vmatpush.msra.mxu0 %v279
  %521 = vmatpush.msra.mxu0 %v276
  %522 = vmatpush.msra.mxu0 %v273
  %523 = vmatpush.msra.mxu0 %v270
  %524 = vmatpush.msra.mxu0 %v267
  %525 = vmatpush.msra.mxu0 %v264
  %526 = vmatpush.msra.mxu0 %v261
  %527 = vmatpush.msra.mxu0 %v258
  %528 = vmatpush.msra.mxu0 %v255
  %529 = vmatpush.msra.mxu0 %v252
  %530 = vmatpush.msra.mxu0 %v249
  %531 = vmatpush.msra.mxu0 %v246
  %532 = vmatpush.msra.mxu0 %v243
  %533 = vmatpush.msra.mxu0 %v240
  %534 = vmatpush.msra.mxu0 %v237
  %535 = vmatmul.f32.gmra.mxu0 %v512
  %v536 = vpop.f32.mrf.mxu0
  %v537 = vadd.f32 %v287, %v536
  %538 = vdwg.mxu0
  %539 = vmatpush.msra.mxu0 %v283
  %540 = vmatpush.msra.mxu0 %v280
  %541 = vmatpush.msra.mxu0 %v277
  %542 = vmatpush.msra.mxu0 %v274
  %543 = vmatpush.msra.mxu0 %v271
  %544 = vmatpush.msra.mxu0 %v268
  %545 = vmatpush.msra.mxu0 %v265
  %546 = vmatpush.msra.mxu0 %v262
  %547 = vmatpush.msra.mxu0 %v259
  %548 = vmatpush.msra.mxu0 %v256
  %549 = vmatpush.msra.mxu0 %v253
  %550 = vmatpush.msra.mxu0 %v250
  %551 = vmatpush.msra.mxu0 %v247
  %552 = vmatpush.msra.mxu0 %v244
  %553 = vmatpush.msra.mxu0 %v241
  %554 = vmatpush.msra.mxu0 %v238
  %555 = vmatmul.f32.gmra.mxu0 %v512
  %v556 = vpop.f32.mrf.mxu0
  %v557 = vadd.f32 %v288, %v556
  %558 = vdwg.mxu0
  %559 = vmatpush.msra.mxu0 %v284
  %560 = vmatpush.msra.mxu0 %v281
  %561 = vmatpush.msra.mxu0 %v278
  %562 = vmatpush.msra.mxu0 %v275
  %563 = vmatpush.msra.mxu0 %v272
  %564 = vmatpush.msra.mxu0 %v269
  %565 = vmatpush.msra.mxu0 %v266
  %566 = vmatpush.msra.mxu0 %v263
  %567 = vmatpush.msra.mxu0 %v260
  %568 = vmatpush.msra.mxu0 %v257
  %569 = vmatpush.msra.mxu0 %v254
  %570 = vmatpush.msra.mxu0 %v251
  %571 = vmatpush.msra.mxu0 %v248
  %572 = vmatpush.msra.mxu0 %v245
  %573 = vmatpush.msra.mxu0 %v242
  %574 = vmatpush.msra.mxu0 %v239
  %575 = vmatmul.f32.gmra.mxu0 %v512
  %v576 = vpop.f32.mrf.mxu0
  %v577 = vadd.f32 %v289, %v576
  %578 = vdwg.mxu0
  %v579 = vadd.f32 %v516, %v537
  %v580 = vxor.u32 %v579, 2147483648
  %v581 = vmul.f32 %v580, 1.442695
  %v582 = vpow.pop %v581
  %v583 = vadd.f32 %v582, 1.0
  %v584 = vrcp.pop %v583
  %v585 = vmul.f32 %v583, %v584
  %v586 = vsub.f32 1.0, %v585
  %v587 = vmul.f32 %v584, %v586
  %v588 = vadd.f32 %v584, %v587
  %vm589 = vweird.f32 %v583
  %vm590 = vweird.f32 %v584
  %vm591 = vmor %vm589, %vm590
  %v592 = vsel %vm591, %v584, %v588
  %v593 = vand.u32 2147483647, %v583
  %vm594 = vcmp.eq.f32.partialorder %v593, 8.507059e+37
  %v595 = vand.u32 %v583, 2147483648
  %v596 = vor.u32 1.1754944e-38, %v595
  %v597 = vsel %vm594, %v596, %v592
  %v598 = vmul.f32 1.0, %v597
  %v599 = vadd.f32 %v517, %v557
  %v600 = vxor.u32 %v599, 2147483648
  %v601 = vmul.f32 %v600, 1.442695
  %v602 = vpow.pop %v601
  %v603 = vadd.f32 %v602, 1.0
  %v604 = vrcp.pop %v603
  %v605 = vmul.f32 %v603, %v604
  %v606 = vsub.f32 1.0, %v605
  %v607 = vmul.f32 %v604, %v606
  %v608 = vadd.f32 %v604, %v607
  %vm609 = vweird.f32 %v603
  %vm610 = vweird.f32 %v604
  %vm611 = vmor %vm609, %vm610
  %v612 = vsel %vm611, %v604, %v608
  %v613 = vand.u32 2147483647, %v603
  %vm614 = vcmp.eq.f32.partialorder %v613, 8.507059e+37
  %v615 = vand.u32 %v603, 2147483648
  %v616 = vor.u32 1.1754944e-38, %v615
  %v617 = vsel %vm614, %v616, %v612
  %v618 = vmul.f32 1.0, %v617
  %v619 = vmul.f32 %v598, %v577
  %v620 = vadd.f32 %v518, %v619
  %v621 = vtanh.pop %v620
  %v622 = vsub.f32 1.0, %v618
  %v623 = vmul.f32 %v622, %v621
  %v624 = vmul.f32 %v618, %v512
  %v625 = vadd.f32 %v623, %v624
  %s626 = smul.u32 3, 3
  %s627 = smul.addr %s626, 8
  %s628 = scalar_lea.vmem [#allocation2], %s627
  %v629 = vld [vmem:[%s628] sm:$0xff]
  %v630 = vld [vmem:[%s628 + $0x8] sm:$0xff]
  %v631 = vld [vmem:[%s628 + $0x10] sm:$0xff]
  %632 = vmatpush.msra.mxu0 %v282
  %633 = vmatpush.msra.mxu0 %v279
  %634 = vmatpush.msra.mxu0 %v276
  %635 = vmatpush.msra.mxu0 %v273
  %636 = vmatpush.msra.mxu0 %v270
  %637 = vmatpush.msra.mxu0 %v267
  %638 = vmatpush.msra.mxu0 %v264
  %639 = vmatpush.msra.mxu0 %v261
  %640 = vmatpush.msra.mxu0 %v258
  %641 = vmatpush.msra.mxu0 %v255
  %642 = vmatpush.msra.mxu0 %v252
  %643 = vmatpush.msra.mxu0 %v249
  %644 = vmatpush.msra.mxu0 %v246
  %645 = vmatpush.msra.mxu0 %v243
  %646 = vmatpush.msra.mxu0 %v240
  %647 = vmatpush.msra.mxu0 %v237
  %648 = vmatmul.f32.gmra.mxu0 %v625
  %v649 = vpop.f32.mrf.mxu0
  %v650 = vadd.f32 %v287, %v649
  %651 = vdwg.mxu0
  %652 = vmatpush.msra.mxu0 %v283
  %653 = vmatpush.msra.mxu0 %v280
  %654 = vmatpush.msra.mxu0 %v277
  %655 = vmatpush.msra.mxu0 %v274
  %656 = vmatpush.msra.mxu0 %v271
  %657 = vmatpush.msra.mxu0 %v268
  %658 = vmatpush.msra.mxu0 %v265
  %659 = vmatpush.msra.mxu0 %v262
  %660 = vmatpush.msra.mxu0 %v259
  %661 = vmatpush.msra.mxu0 %v256
  %662 = vmatpush.msra.mxu0 %v253
  %663 = vmatpush.msra.mxu0 %v250
  %664 = vmatpush.msra.mxu0 %v247
  %665 = vmatpush.msra.mxu0 %v244
  %666 = vmatpush.msra.mxu0 %v241
  %667 = vmatpush.msra.mxu0 %v238
  %668 = vmatmul.f32.gmra.mxu0 %v625
  %v669 = vpop.f32.mrf.mxu0
  %v670 = vadd.f32 %v288, %v669
  %671 = vdwg.mxu0
  %672 = vmatpush.msra.mxu0 %v284
  %673 = vmatpush.msra.mxu0 %v281
  %674 = vmatpush.msra.mxu0 %v278
  %675 = vmatpush.msra.mxu0 %v275
  %676 = vmatpush.msra.mxu0 %v272
  %677 = vmatpush.msra.mxu0 %v269
  %678 = vmatpush.msra.mxu0 %v266
  %679 = vmatpush.msra.mxu0 %v263
  %680 = vmatpush.msra.mxu0 %v260
  %681 = vmatpush.msra.mxu0 %v257
  %682 = vmatpush.msra.mxu0 %v254
  %683 = vmatpush.msra.mxu0 %v251
  %684 = vmatpush.msra.mxu0 %v248
  %685 = vmatpush.msra.mxu0 %v245
  %686 = vmatpush.msra.mxu0 %v242
  %687 = vmatpush.msra.mxu0 %v239
  %688 = vmatmul.f32.gmra.mxu0 %v625
  %v689 = vpop.f32.mrf.mxu0
  %v690 = vadd.f32 %v289, %v689
  %691 = vdwg.mxu0
  %v692 = vadd.f32 %v629, %v650
  %v693 = vxor.u32 %v692, 2147483648
  %v694 = vmul.f32 %v693, 1.442695
  %v695 = vpow.pop %v694
  %v696 = vadd.f32 %v695, 1.0
  %v697 = vrcp.pop %v696
  %v698 = vmul.f32 %v696, %v697
  %v699 = vsub.f32 1.0, %v698
  %v700 = vmul.f32 %v697, %v699
  %v701 = vadd.f32 %v697, %v700
  %vm702 = vweird.f32 %v696
  %vm703 = vweird.f32 %v697
  %vm704 = vmor %vm702, %vm703
  %v705 = vsel %vm704, %v697, %v701
  %v706 = vand.u32 2147483647, %v696
  %vm707 = vcmp.eq.f32.partialorder %v706, 8.507059e+37
  %v708 = vand.u32 %v696, 2147483648
  %v709 = vor.u32 1.1754944e-38, %v708
  %v710 = vsel %vm707, %v709, %v705
  %v711 = vmul.f32 1.0, %v710
  %v712 = vadd.f32 %v630, %v670
  %v713 = vxor.u32 %v712, 2147483648
  %v714 = vmul.f32 %v713, 1.442695
  %v715 = vpow.pop %v714
  %v716 = vadd.f32 %v715, 1.0
  %v717 = vrcp.pop %v716
  %v718 = vmul.f32 %v716, %v717
  %v719 = vsub.f32 1.0, %v718
  %v720 = vmul.f32 %v717, %v719
  %v721 = vadd.f32 %v717, %v720
  %vm722 = vweird.f32 %v716
  %vm723 = vweird.f32 %v717
  %vm724 = vmor %vm722, %vm723
  %v725 = vsel %vm724, %v717, %v721
  %v726 = vand.u32 2147483647, %v716
  %vm727 = vcmp.eq.f32.partialorder %v726, 8.507059e+37
  %v728 = vand.u32 %v716, 2147483648
  %v729 = vor.u32 1.1754944e-38, %v728
  %v730 = vsel %vm727, %v729, %v725
  %v731 = vmul.f32 1.0, %v730
  %v732 = vmul.f32 %v711, %v690
  %v733 = vadd.f32 %v631, %v732
  %v734 = vtanh.pop %v733
  %v735 = vsub.f32 1.0, %v731
  %v736 = vmul.f32 %v735, %v734
  %v737 = vmul.f32 %v731, %v625
  %v738 = vadd.f32 %v736, %v737
  %s739 = smul.u32 4, 3
  %s740 = smul.addr %s739, 8
  %s741 = scalar_lea.vmem [#allocation2], %s740
  %v742 = vld [vmem:[%s741] sm:$0xff]
  %v743 = vld [vmem:[%s741 + $0x8] sm:$0xff]
  %v744 = vld [vmem:[%s741 + $0x10] sm:$0xff]
  %745 = vmatpush.msra.mxu0 %v282
  %746 = vmatpush.msra.mxu0 %v279
  %747 = vmatpush.msra.mxu0 %v276
  %748 = vmatpush.msra.mxu0 %v273
  %749 = vmatpush.msra.mxu0 %v270
  %750 = vmatpush.msra.mxu0 %v267
  %751 = vmatpush.msra.mxu0 %v264
  %752 = vmatpush.msra.mxu0 %v261
  %753 = vmatpush.msra.mxu0 %v258
  %754 = vmatpush.msra.mxu0 %v255
  %755 = vmatpush.msra.mxu0 %v252
  %756 = vmatpush.msra.mxu0 %v249
  %757 = vmatpush.msra.mxu0 %v246
  %758 = vmatpush.msra.mxu0 %v243
  %759 = vmatpush.msra.mxu0 %v240
  %760 = vmatpush.msra.mxu0 %v237
  %761 = vmatmul.f32.gmra.mxu0 %v738
  %v762 = vpop.f32.mrf.mxu0
  %v763 = vadd.f32 %v287, %v762
  %764 = vdwg.mxu0
  %765 = vmatpush.msra.mxu0 %v283
  %766 = vmatpush.msra.mxu0 %v280
  %767 = vmatpush.msra.mxu0 %v277
  %768 = vmatpush.msra.mxu0 %v274
  %769 = vmatpush.msra.mxu0 %v271
  %770 = vmatpush.msra.mxu0 %v268
  %771 = vmatpush.msra.mxu0 %v265
  %772 = vmatpush.msra.mxu0 %v262
  %773 = vmatpush.msra.mxu0 %v259
  %774 = vmatpush.msra.mxu0 %v256
  %775 = vmatpush.msra.mxu0 %v253
  %776 = vmatpush.msra.mxu0 %v250
  %777 = vmatpush.msra.mxu0 %v247
  %778 = vmatpush.msra.mxu0 %v244
  %779 = vmatpush.msra.mxu0 %v241
  %780 = vmatpush.msra.mxu0 %v238
  %781 = vmatmul.f32.gmra.mxu0 %v738
  %v782 = vpop.f32.mrf.mxu0
  %v783 = vadd.f32 %v288, %v782
  %784 = vdwg.mxu0
  %785 = vmatpush.msra.mxu0 %v284
  %786 = vmatpush.msra.mxu0 %v281
  %787 = vmatpush.msra.mxu0 %v278
  %788 = vmatpush.msra.mxu0 %v275
  %789 = vmatpush.msra.mxu0 %v272
  %790 = vmatpush.msra.mxu0 %v269
  %791 = vmatpush.msra.mxu0 %v266
  %792 = vmatpush.msra.mxu0 %v263
  %793 = vmatpush.msra.mxu0 %v260
  %794 = vmatpush.msra.mxu0 %v257
  %795 = vmatpush.msra.mxu0 %v254
  %796 = vmatpush.msra.mxu0 %v251
  %797 = vmatpush.msra.mxu0 %v248
  %798 = vmatpush.msra.mxu0 %v245
  %799 = vmatpush.msra.mxu0 %v242
  %800 = vmatpush.msra.mxu0 %v239
  %801 = vmatmul.f32.gmra.mxu0 %v738
  %v802 = vpop.f32.mrf.mxu0
  %v803 = vadd.f32 %v289, %v802
  %804 = vdwg.mxu0
  %v805 = vadd.f32 %v742, %v763
  %v806 = vxor.u32 %v805, 2147483648
  %v807 = vmul.f32 %v806, 1.442695
  %v808 = vpow.pop %v807
  %v809 = vadd.f32 %v808, 1.0
  %v810 = vrcp.pop %v809
  %v811 = vmul.f32 %v809, %v810
  %v812 = vsub.f32 1.0, %v811
  %v813 = vmul.f32 %v810, %v812
  %v814 = vadd.f32 %v810, %v813
  %vm815 = vweird.f32 %v809
  %vm816 = vweird.f32 %v810
  %vm817 = vmor %vm815, %vm816
  %v818 = vsel %vm817, %v810, %v814
  %v819 = vand.u32 2147483647, %v809
  %vm820 = vcmp.eq.f32.partialorder %v819, 8.507059e+37
  %v821 = vand.u32 %v809, 2147483648
  %v822 = vor.u32 1.1754944e-38, %v821
  %v823 = vsel %vm820, %v822, %v818
  %v824 = vmul.f32 1.0, %v823
  %v825 = vadd.f32 %v743, %v783
  %v826 = vxor.u32 %v825, 2147483648
  %v827 = vmul.f32 %v826, 1.442695
  %v828 = vpow.pop %v827
  %v829 = vadd.f32 %v828, 1.0
  %v830 = vrcp.pop %v829
  %v831 = vmul.f32 %v829, %v830
  %v832 = vsub.f32 1.0, %v831
  %v833 = vmul.f32 %v830, %v832
  %v834 = vadd.f32 %v830, %v833
  %vm835 = vweird.f32 %v829
  %vm836 = vweird.f32 %v830
  %vm837 = vmor %vm835, %vm836
  %v838 = vsel %vm837, %v830, %v834
  %v839 = vand.u32 2147483647, %v829
  %vm840 = vcmp.eq.f32.partialorder %v839, 8.507059e+37
  %v841 = vand.u32 %v829, 2147483648
  %v842 = vor.u32 1.1754944e-38, %v841
  %v843 = vsel %vm840, %v842, %v838
  %v844 = vmul.f32 1.0, %v843
  %v845 = vmul.f32 %v824, %v803
  %v846 = vadd.f32 %v744, %v845
  %v847 = vtanh.pop %v846
  %v848 = vsub.f32 1.0, %v844
  %v849 = vmul.f32 %v848, %v847
  %v850 = vmul.f32 %v844, %v738
  %v851 = vadd.f32 %v849, %v850
  %s852 = smul.u32 5, 3
  %s853 = smul.addr %s852, 8
  %s854 = scalar_lea.vmem [#allocation2], %s853
  %v855 = vld [vmem:[%s854] sm:$0xff]
  %v856 = vld [vmem:[%s854 + $0x8] sm:$0xff]
  %v857 = vld [vmem:[%s854 + $0x10] sm:$0xff]
  %858 = vmatpush.msra.mxu0 %v282
  %859 = vmatpush.msra.mxu0 %v279
  %860 = vmatpush.msra.mxu0 %v276
  %861 = vmatpush.msra.mxu0 %v273
  %862 = vmatpush.msra.mxu0 %v270
  %863 = vmatpush.msra.mxu0 %v267
  %864 = vmatpush.msra.mxu0 %v264
  %865 = vmatpush.msra.mxu0 %v261
  %866 = vmatpush.msra.mxu0 %v258
  %867 = vmatpush.msra.mxu0 %v255
  %868 = vmatpush.msra.mxu0 %v252
  %869 = vmatpush.msra.mxu0 %v249
  %870 = vmatpush.msra.mxu0 %v246
  %871 = vmatpush.msra.mxu0 %v243
  %872 = vmatpush.msra.mxu0 %v240
  %873 = vmatpush.msra.mxu0 %v237
  %874 = vmatmul.f32.gmra.mxu0 %v851
  %v875 = vpop.f32.mrf.mxu0
  %v876 = vadd.f32 %v287, %v875
  %877 = vdwg.mxu0
  %878 = vmatpush.msra.mxu0 %v283
  %879 = vmatpush.msra.mxu0 %v280
  %880 = vmatpush.msra.mxu0 %v277
  %881 = vmatpush.msra.mxu0 %v274
  %882 = vmatpush.msra.mxu0 %v271
  %883 = vmatpush.msra.mxu0 %v268
  %884 = vmatpush.msra.mxu0 %v265
  %885 = vmatpush.msra.mxu0 %v262
  %886 = vmatpush.msra.mxu0 %v259
  %887 = vmatpush.msra.mxu0 %v256
  %888 = vmatpush.msra.mxu0 %v253
  %889 = vmatpush.msra.mxu0 %v250
  %890 = vmatpush.msra.mxu0 %v247
  %891 = vmatpush.msra.mxu0 %v244
  %892 = vmatpush.msra.mxu0 %v241
  %893 = vmatpush.msra.mxu0 %v238
  %894 = vmatmul.f32.gmra.mxu0 %v851
  %v895 = vpop.f32.mrf.mxu0
  %v896 = vadd.f32 %v288, %v895
  %897 = vdwg.mxu0
  %898 = vmatpush.msra.mxu0 %v284
  %899 = vmatpush.msra.mxu0 %v281
  %900 = vmatpush.msra.mxu0 %v278
  %901 = vmatpush.msra.mxu0 %v275
  %902 = vmatpush.msra.mxu0 %v272
  %903 = vmatpush.msra.mxu0 %v269
  %904 = vmatpush.msra.mxu0 %v266
  %905 = vmatpush.msra.mxu0 %v263
  %906 = vmatpush.msra.mxu0 %v260
  %907 = vmatpush.msra.mxu0 %v257
  %908 = vmatpush.msra.mxu0 %v254
  %909 = vmatpush.msra.mxu0 %v251
  %910 = vmatpush.msra.mxu0 %v248
  %911 = vmatpush.msra.mxu0 %v245
  %912 = vmatpush.msra.mxu0 %v242
  %913 = vmatpush.msra.mxu0 %v239
  %914 = vmatmul.f32.gmra.mxu0 %v851
  %v915 = vpop.f32.mrf.mxu0
  %v916 = vadd.f32 %v289, %v915
  %917 = vdwg.mxu0
  %v918 = vadd.f32 %v855, %v876
  %v919 = vxor.u32 %v918, 2147483648
  %v920 = vmul.f32 %v919, 1.442695
  %v921 = vpow.pop %v920
  %v922 = vadd.f32 %v921, 1.0
  %v923 = vrcp.pop %v922
  %v924 = vmul.f32 %v922, %v923
  %v925 = vsub.f32 1.0, %v924
  %v926 = vmul.f32 %v923, %v925
  %v927 = vadd.f32 %v923, %v926
  %vm928 = vweird.f32 %v922
  %vm929 = vweird.f32 %v923
  %vm930 = vmor %vm928, %vm929
  %v931 = vsel %vm930, %v923, %v927
  %v932 = vand.u32 2147483647, %v922
  %vm933 = vcmp.eq.f32.partialorder %v932, 8.507059e+37
  %v934 = vand.u32 %v922, 2147483648
  %v935 = vor.u32 1.1754944e-38, %v934
  %v936 = vsel %vm933, %v935, %v931
  %v937 = vmul.f32 1.0, %v936
  %v938 = vadd.f32 %v856, %v896
  %v939 = vxor.u32 %v938, 2147483648
  %v940 = vmul.f32 %v939, 1.442695
  %v941 = vpow.pop %v940
  %v942 = vadd.f32 %v941, 1.0
  %v943 = vrcp.pop %v942
  %v944 = vmul.f32 %v942, %v943
  %v945 = vsub.f32 1.0, %v944
  %v946 = vmul.f32 %v943, %v945
  %v947 = vadd.f32 %v943, %v946
  %vm948 = vweird.f32 %v942
  %vm949 = vweird.f32 %v943
  %vm950 = vmor %vm948, %vm949
  %v951 = vsel %vm950, %v943, %v947
  %v952 = vand.u32 2147483647, %v942
  %vm953 = vcmp.eq.f32.partialorder %v952, 8.507059e+37
  %v954 = vand.u32 %v942, 2147483648
  %v955 = vor.u32 1.1754944e-38, %v954
  %v956 = vsel %vm953, %v955, %v951
  %v957 = vmul.f32 1.0, %v956
  %v958 = vmul.f32 %v937, %v916
  %v959 = vadd.f32 %v857, %v958
  %v960 = vtanh.pop %v959
  %v961 = vsub.f32 1.0, %v957
  %v962 = vmul.f32 %v961, %v960
  %v963 = vmul.f32 %v957, %v851
  %v964 = vadd.f32 %v962, %v963
  %s965 = smul.u32 6, 3
  %s966 = smul.addr %s965, 8
  %s967 = scalar_lea.vmem [#allocation2], %s966
  %v968 = vld [vmem:[%s967] sm:$0xff]
  %v969 = vld [vmem:[%s967 + $0x8] sm:$0xff]
  %v970 = vld [vmem:[%s967 + $0x10] sm:$0xff]
  %971 = vmatpush.msra.mxu0 %v282
  %972 = vmatpush.msra.mxu0 %v279
  %973 = vmatpush.msra.mxu0 %v276
  %974 = vmatpush.msra.mxu0 %v273
  %975 = vmatpush.msra.mxu0 %v270
  %976 = vmatpush.msra.mxu0 %v267
  %977 = vmatpush.msra.mxu0 %v264
  %978 = vmatpush.msra.mxu0 %v261
  %979 = vmatpush.msra.mxu0 %v258
  %980 = vmatpush.msra.mxu0 %v255
  %981 = vmatpush.msra.mxu0 %v252
  %982 = vmatpush.msra.mxu0 %v249
  %983 = vmatpush.msra.mxu0 %v246
  %984 = vmatpush.msra.mxu0 %v243
  %985 = vmatpush.msra.mxu0 %v240
  %986 = vmatpush.msra.mxu0 %v237
  %987 = vmatmul.f32.gmra.mxu0 %v964
  %v988 = vpop.f32.mrf.mxu0
  %v989 = vadd.f32 %v287, %v988
  %990 = vdwg.mxu0
  %991 = vmatpush.msra.mxu0 %v283
  %992 = vmatpush.msra.mxu0 %v280
  %993 = vmatpush.msra.mxu0 %v277
  %994 = vmatpush.msra.mxu0 %v274
  %995 = vmatpush.msra.mxu0 %v271
  %996 = vmatpush.msra.mxu0 %v268
  %997 = vmatpush.msra.mxu0 %v265
  %998 = vmatpush.msra.mxu0 %v262
  %999 = vmatpush.msra.mxu0 %v259
  %1000 = vmatpush.msra.mxu0 %v256
  %1001 = vmatpush.msra.mxu0 %v253
  %1002 = vmatpush.msra.mxu0 %v250
  %1003 = vmatpush.msra.mxu0 %v247
  %1004 = vmatpush.msra.mxu0 %v244
  %1005 = vmatpush.msra.mxu0 %v241
  %1006 = vmatpush.msra.mxu0 %v238
  %1007 = vmatmul.f32.gmra.mxu0 %v964
  %v1008 = vpop.f32.mrf.mxu0
  %v1009 = vadd.f32 %v288, %v1008
  %1010 = vdwg.mxu0
  %1011 = vmatpush.msra.mxu0 %v284
  %1012 = vmatpush.msra.mxu0 %v281
  %1013 = vmatpush.msra.mxu0 %v278
  %1014 = vmatpush.msra.mxu0 %v275
  %1015 = vmatpush.msra.mxu0 %v272
  %1016 = vmatpush.msra.mxu0 %v269
  %1017 = vmatpush.msra.mxu0 %v266
  %1018 = vmatpush.msra.mxu0 %v263
  %1019 = vmatpush.msra.mxu0 %v260
  %1020 = vmatpush.msra.mxu0 %v257
  %1021 = vmatpush.msra.mxu0 %v254
  %1022 = vmatpush.msra.mxu0 %v251
  %1023 = vmatpush.msra.mxu0 %v248
  %1024 = vmatpush.msra.mxu0 %v245
  %1025 = vmatpush.msra.mxu0 %v242
  %1026 = vmatpush.msra.mxu0 %v239
  %1027 = vmatmul.f32.gmra.mxu0 %v964
  %v1028 = vpop.f32.mrf.mxu0
  %v1029 = vadd.f32 %v289, %v1028
  %1030 = vdwg.mxu0
  %v1031 = vadd.f32 %v968, %v989
  %v1032 = vxor.u32 %v1031, 2147483648
  %v1033 = vmul.f32 %v1032, 1.442695
  %v1034 = vpow.pop %v1033
  %v1035 = vadd.f32 %v1034, 1.0
  %v1036 = vrcp.pop %v1035
  %v1037 = vmul.f32 %v1035, %v1036
  %v1038 = vsub.f32 1.0, %v1037
  %v1039 = vmul.f32 %v1036, %v1038
  %v1040 = vadd.f32 %v1036, %v1039
  %vm1041 = vweird.f32 %v1035
  %vm1042 = vweird.f32 %v1036
  %vm1043 = vmor %vm1041, %vm1042
  %v1044 = vsel %vm1043, %v1036, %v1040
  %v1045 = vand.u32 2147483647, %v1035
  %vm1046 = vcmp.eq.f32.partialorder %v1045, 8.507059e+37
  %v1047 = vand.u32 %v1035, 2147483648
  %v1048 = vor.u32 1.1754944e-38, %v1047
  %v1049 = vsel %vm1046, %v1048, %v1044
  %v1050 = vmul.f32 1.0, %v1049
  %v1051 = vadd.f32 %v969, %v1009
  %v1052 = vxor.u32 %v1051, 2147483648
  %v1053 = vmul.f32 %v1052, 1.442695
  %v1054 = vpow.pop %v1053
  %v1055 = vadd.f32 %v1054, 1.0
  %v1056 = vrcp.pop %v1055
  %v1057 = vmul.f32 %v1055, %v1056
  %v1058 = vsub.f32 1.0, %v1057
  %v1059 = vmul.f32 %v1056, %v1058
  %v1060 = vadd.f32 %v1056, %v1059
  %vm1061 = vweird.f32 %v1055
  %vm1062 = vweird.f32 %v1056
  %vm1063 = vmor %vm1061, %vm1062
  %v1064 = vsel %vm1063, %v1056, %v1060
  %v1065 = vand.u32 2147483647, %v1055
  %vm1066 = vcmp.eq.f32.partialorder %v1065, 8.507059e+37
  %v1067 = vand.u32 %v1055, 2147483648
  %v1068 = vor.u32 1.1754944e-38, %v1067
  %v1069 = vsel %vm1066, %v1068, %v1064
  %v1070 = vmul.f32 1.0, %v1069
  %v1071 = vmul.f32 %v1050, %v1029
  %v1072 = vadd.f32 %v970, %v1071
  %v1073 = vtanh.pop %v1072
  %v1074 = vsub.f32 1.0, %v1070
  %v1075 = vmul.f32 %v1074, %v1073
  %v1076 = vmul.f32 %v1070, %v964
  %v1077 = vadd.f32 %v1075, %v1076
  %s1078 = smul.u32 7, 3
  %s1079 = smul.addr %s1078, 8
  %s1080 = scalar_lea.vmem [#allocation2], %s1079
  %v1081 = vld [vmem:[%s1080] sm:$0xff]
  %v1082 = vld [vmem:[%s1080 + $0x8] sm:$0xff]
  %v1083 = vld [vmem:[%s1080 + $0x10] sm:$0xff]
  %1084 = vmatpush.msra.mxu0 %v282
  %1085 = vmatpush.msra.mxu0 %v279
  %1086 = vmatpush.msra.mxu0 %v276
  %1087 = vmatpush.msra.mxu0 %v273
  %1088 = vmatpush.msra.mxu0 %v270
  %1089 = vmatpush.msra.mxu0 %v267
  %1090 = vmatpush.msra.mxu0 %v264
  %1091 = vmatpush.msra.mxu0 %v261
  %1092 = vmatpush.msra.mxu0 %v258
  %1093 = vmatpush.msra.mxu0 %v255
  %1094 = vmatpush.msra.mxu0 %v252
  %1095 = vmatpush.msra.mxu0 %v249
  %1096 = vmatpush.msra.mxu0 %v246
  %1097 = vmatpush.msra.mxu0 %v243
  %1098 = vmatpush.msra.mxu0 %v240
  %1099 = vmatpush.msra.mxu0 %v237
  %1100 = vmatmul.f32.gmra.mxu0 %v1077
  %v1101 = vpop.f32.mrf.mxu0
  %v1102 = vadd.f32 %v287, %v1101
  %1103 = vdwg.mxu0
  %1104 = vmatpush.msra.mxu0 %v283
  %1105 = vmatpush.msra.mxu0 %v280
  %1106 = vmatpush.msra.mxu0 %v277
  %1107 = vmatpush.msra.mxu0 %v274
  %1108 = vmatpush.msra.mxu0 %v271
  %1109 = vmatpush.msra.mxu0 %v268
  %1110 = vmatpush.msra.mxu0 %v265
  %1111 = vmatpush.msra.mxu0 %v262
  %1112 = vmatpush.msra.mxu0 %v259
  %1113 = vmatpush.msra.mxu0 %v256
  %1114 = vmatpush.msra.mxu0 %v253
  %1115 = vmatpush.msra.mxu0 %v250
  %1116 = vmatpush.msra.mxu0 %v247
  %1117 = vmatpush.msra.mxu0 %v244
  %1118 = vmatpush.msra.mxu0 %v241
  %1119 = vmatpush.msra.mxu0 %v238
  %1120 = vmatmul.f32.gmra.mxu0 %v1077
  %v1121 = vpop.f32.mrf.mxu0
  %v1122 = vadd.f32 %v288, %v1121
  %1123 = vdwg.mxu0
  %1124 = vmatpush.msra.mxu0 %v284
  %1125 = vmatpush.msra.mxu0 %v281
  %1126 = vmatpush.msra.mxu0 %v278
  %1127 = vmatpush.msra.mxu0 %v275
  %1128 = vmatpush.msra.mxu0 %v272
  %1129 = vmatpush.msra.mxu0 %v269
  %1130 = vmatpush.msra.mxu0 %v266
  %1131 = vmatpush.msra.mxu0 %v263
  %1132 = vmatpush.msra.mxu0 %v260
  %1133 = vmatpush.msra.mxu0 %v257
  %1134 = vmatpush.msra.mxu0 %v254
  %1135 = vmatpush.msra.mxu0 %v251
  %1136 = vmatpush.msra.mxu0 %v248
  %1137 = vmatpush.msra.mxu0 %v245
  %1138 = vmatpush.msra.mxu0 %v242
  %1139 = vmatpush.msra.mxu0 %v239
  %1140 = vmatmul.f32.gmra.mxu0 %v1077
  %v1141 = vpop.f32.mrf.mxu0
  %v1142 = vadd.f32 %v289, %v1141
  %1143 = vdwg.mxu0
  %v1144 = vadd.f32 %v1081, %v1102
  %v1145 = vxor.u32 %v1144, 2147483648
  %v1146 = vmul.f32 %v1145, 1.442695
  %v1147 = vpow.pop %v1146
  %v1148 = vadd.f32 %v1147, 1.0
  %v1149 = vrcp.pop %v1148
  %v1150 = vmul.f32 %v1148, %v1149
  %v1151 = vsub.f32 1.0, %v1150
  %v1152 = vmul.f32 %v1149, %v1151
  %v1153 = vadd.f32 %v1149, %v1152
  %vm1154 = vweird.f32 %v1148
  %vm1155 = vweird.f32 %v1149
  %vm1156 = vmor %vm1154, %vm1155
  %v1157 = vsel %vm1156, %v1149, %v1153
  %v1158 = vand.u32 2147483647, %v1148
  %vm1159 = vcmp.eq.f32.partialorder %v1158, 8.507059e+37
  %v1160 = vand.u32 %v1148, 2147483648
  %v1161 = vor.u32 1.1754944e-38, %v1160
  %v1162 = vsel %vm1159, %v1161, %v1157
  %v1163 = vmul.f32 1.0, %v1162
  %v1164 = vadd.f32 %v1082, %v1122
  %v1165 = vxor.u32 %v1164, 2147483648
  %v1166 = vmul.f32 %v1165, 1.442695
  %v1167 = vpow.pop %v1166
  %v1168 = vadd.f32 %v1167, 1.0
  %v1169 = vrcp.pop %v1168
  %v1170 = vmul.f32 %v1168, %v1169
  %v1171 = vsub.f32 1.0, %v1170
  %v1172 = vmul.f32 %v1169, %v1171
  %v1173 = vadd.f32 %v1169, %v1172
  %vm1174 = vweird.f32 %v1168
  %vm1175 = vweird.f32 %v1169
  %vm1176 = vmor %vm1174, %vm1175
  %v1177 = vsel %vm1176, %v1169, %v1173
  %v1178 = vand.u32 2147483647, %v1168
  %vm1179 = vcmp.eq.f32.partialorder %v1178, 8.507059e+37
  %v1180 = vand.u32 %v1168, 2147483648
  %v1181 = vor.u32 1.1754944e-38, %v1180
  %v1182 = vsel %vm1179, %v1181, %v1177
  %v1183 = vmul.f32 1.0, %v1182
  %v1184 = vmul.f32 %v1163, %v1142
  %v1185 = vadd.f32 %v1083, %v1184
  %v1186 = vtanh.pop %v1185
  %v1187 = vsub.f32 1.0, %v1183
  %v1188 = vmul.f32 %v1187, %v1186
  %v1189 = vmul.f32 %v1183, %v1077
  %v1190 = vadd.f32 %v1188, %v1189
  %1191 = vst [vmem:[%s5] sm:$0xff] %v1190
  // Predicated region
  $region22: #{encoder_forward.1} parent=0 // pred_check
    _
  $region23: #{encoder_forward.1} parent=0 // pred_check_branch
    %1193 = sbr.rel (0) target = $region25
  $region24: #{encoder_forward.1} parent=0 // pred_region
    _
  $region25: #{encoder_forward.1} parent=0 // pred_fallthru
    _
  // Predicated region
  $region26: #{encoder_forward.1} parent=0 // pred_check
    _
  $region27: #{encoder_forward.1} parent=0 // pred_check_branch
    %1195 = sbr.rel (0) target = $region29
  $region28: #{encoder_forward.1} parent=0 // pred_region
    _
  $region29: #{encoder_forward.1} parent=0 // pred_fallthru
    _

</llo_original>
